<compile_context>
chip_gen: v7x
topology: tpu7x:2x2x1
jax: 0.10.0
libtpu: 0.0.40
codegen_flags: <defaults>
</compile_context>

<pallas_src>
import jax
import jax.numpy as jnp
import numpy as np
from jax.experimental import pallas as pl
from jax.experimental.pallas import tpu as pltpu  # noqa: F401  (TPU backend)

NEG_SLOPE = 0.01  # torch.nn.functional.leaky_relu default negative_slope


def _lrelu(v):
    return jnp.where(v > 0, v, NEG_SLOPE * v)


# ---------------------------------------------------------------------------
# Fused Pallas kernel: full CNN forward, everything VMEM-resident.
# ---------------------------------------------------------------------------
def _cnn_kernel(x_ref, m1_ref, b1_ref, m2_ref, b2_ref, g_ref,
                bf1_ref, wf2_ref, bf2_ref, wf3_ref, bf3_ref, o_ref):
    xr = x_ref[...]                                       # (14, 56): row pairs in lanes

    # ---- conv1 (1->6, k=5, VALID) as 3 shifted MXU matmuls ----------------
    # Y1[pi, 256*rp + 128*cp + oc*12 + pj] = conv1[oc, 2*pi+rp, 2*pj+cp]
    acc1 = jnp.dot(xr[0:12, :], m1_ref[0], preferred_element_type=jnp.float32)
    for s in range(1, 3):
        acc1 = acc1 + jnp.dot(xr[s:s + 12, :], m1_ref[s],
                              preferred_element_type=jnp.float32)
    # ---- 2x2/2 max pool #1: both parities live in 128-lane chunks ----------
    p1 = jnp.maximum(jnp.maximum(acc1[:, 0:128], acc1[:, 128:256]),
                     jnp.maximum(acc1[:, 256:384], acc1[:, 384:512]))
    h1 = _lrelu(p1 + b1_ref[...])                         # (12,128) lane = ic*12 + col

    # ---- conv2 (6->16, k=5, VALID) as 5 row-shifted MXU matmuls ------------
    # Y2[i2, 128*cp + pj*16 + oc] = conv2[oc, i2, 2*pj+cp]
    acc2 = jnp.dot(h1[0:8, :], m2_ref[0], preferred_element_type=jnp.float32)
    for ki in range(1, 5):
        acc2 = acc2 + jnp.dot(h1[ki:ki + 8, :], m2_ref[ki],
                              preferred_element_type=jnp.float32)
    # ---- pool #2 (W direction) + bias + leaky-relu --------------------------
    act2 = _lrelu(jnp.maximum(acc2[:, 0:128], acc2[:, 128:256]) + b2_ref[...])  # (8,128)

    # ---- pool #2 (H direction) + CHW flatten + fc1 (fused) ------------------
    h = bf1_ref[...]                                      # (1, 128)
    for pi in range(4):
        prow = jnp.maximum(act2[2 * pi:2 * pi + 1, :],
                           act2[2 * pi + 1:2 * pi + 2, :])    # (1,128)
        h = h + jnp.dot(prow, g_ref[pi], preferred_element_type=jnp.float32)
    h = _lrelu(h)                                         # (1, 128)

    # ---- fc2, fc3 ------------------------------------------------------------
    h2 = _lrelu(jnp.dot(h, wf2_ref[...], preferred_element_type=jnp.float32)
                + bf2_ref[...])                           # (1, 128)
    o_ref[...] = (jnp.dot(h2, wf3_ref[...], preferred_element_type=jnp.float32)
                  + bf3_ref[...])                         # (1, 10)


# ---------------------------------------------------------------------------
# One-time host-side weight re-packing (hoisted out of the forward path).
# ---------------------------------------------------------------------------
def prepare_params(p):
    w1 = np.asarray(p["w1"], np.float32)      # (6,1,5,5)
    b1 = np.asarray(p["b1"], np.float32)      # (6,)
    w2 = np.asarray(p["w2"], np.float32)      # (16,6,5,5)
    b2 = np.asarray(p["b2"], np.float32)      # (16,)
    wf1 = np.asarray(p["w_fc1"], np.float32)  # (128,256)
    bf1 = np.asarray(p["b_fc1"], np.float32)  # (128,)
    wf2 = np.asarray(p["w_fc2"], np.float32)  # (128,128)
    bf2 = np.asarray(p["b_fc2"], np.float32)  # (128,)
    wf3 = np.asarray(p["w_fc3"], np.float32)  # (10,128)
    bf3 = np.asarray(p["b_fc3"], np.float32)  # (10,)

    # conv1 tap matrices.  Packed input xr (14,56): xr[s, 28*p + c] = x[2s+p, c].
    # Y1[pi, 256*rp + 128*cp + oc*12 + pj] = sum_s (xr[s:s+12] @ M1[s])[pi, lane]
    M1 = np.zeros((3, 56, 512), np.float32)
    for oc in range(6):
        for rp in range(2):
            for cp in range(2):
                for pj in range(12):
                    lane = 256 * rp + 128 * cp + oc * 12 + pj
                    for ki in range(5):
                        q = rp + ki
                        s, pp = q // 2, q % 2
                        for kj in range(5):
                            c = 2 * pj + cp + kj            # < 28 always
                            M1[s, 28 * pp + c, lane] += w1[oc, 0, ki, kj]
    b1r = np.zeros((1, 128), np.float32)
    for oc in range(6):
        b1r[0, oc * 12:(oc + 1) * 12] = b1[oc]

    # conv2 tap matrices over pooled h1 (12,128; lane = ic*12 + col).
    # Y2[i2, 128*cp + pj*16 + oc] = sum_ki (h1[ki:ki+8] @ M2[ki])[i2, lane]
    M2 = np.zeros((5, 128, 256), np.float32)
    for oc in range(16):
        for cp in range(2):
            for pj in range(4):
                lane = 128 * cp + pj * 16 + oc
                for ic in range(6):
                    for ki in range(5):
                        for kj in range(5):
                            c = 2 * pj + cp + kj            # < 12 always
                            M2[ki, ic * 12 + c, lane] += w2[oc, ic, ki, kj]
    b2r = np.zeros((1, 128), np.float32)
    for oc in range(16):
        for pj in range(4):
            b2r[0, pj * 16 + oc] = b2[oc]

    # fc1 weight re-packed so (pool2 row pi, lane = 16*pj + oc) contracts
    # against PyTorch's CHW flatten index oc*16 + pi*4 + pj.
    G = np.zeros((4, 128, 128), np.float32)
    for pi in range(4):
        for pj in range(4):
            for oc in range(16):
                G[pi, 16 * pj + oc, :] = wf1[:, oc * 16 + pi * 4 + pj]

    return {
        "M1": jnp.asarray(M1), "b1r": jnp.asarray(b1r),
        "M2": jnp.asarray(M2), "b2r": jnp.asarray(b2r),
        "G": jnp.asarray(G),
        "bf1": jnp.asarray(bf1.reshape(1, 128)),
        "Wf2": jnp.asarray(np.ascontiguousarray(wf2.T)),
        "bf2": jnp.asarray(bf2.reshape(1, 128)),
        "Wf3": jnp.asarray(np.ascontiguousarray(wf3.T)),
        "bf3": jnp.asarray(bf3.reshape(1, 10)),
    }


# ---------------------------------------------------------------------------
# Forward pass: one pallas_call, whole-array VMEM blocks (no grid needed).
# ---------------------------------------------------------------------------
@jax.jit
def cnn_forward(x, prep):
    # x.view(1,28,28); contiguous reshape to (14,56) packs row pairs into lanes.
    xr = x.reshape(14, 56).astype(jnp.float32)
    return pl.pallas_call(
        _cnn_kernel,
        out_shape=jax.ShapeDtypeStruct((1, 10), jnp.float32),
    )(xr, prep["M1"], prep["b1r"], prep["M2"], prep["b2r"], prep["G"],
      prep["bf1"], prep["Wf2"], prep["bf2"], prep["Wf3"], prep["bf3"])


# ---------------------------------------------------------------------------
# Pure-JAX reference (PyTorch semantics) for a self-check
# ---------------------------------------------------------------------------
def reference_forward(x, p):
    lrelu = lambda v: jnp.where(v > 0, v, NEG_SLOPE * v)
    y = x.reshape(1, 1, 28, 28)
    y = jax.lax.conv_general_dilated(
        y, p["w1"], (1, 1), "VALID", dimension_numbers=("NCHW", "OIHW", "NCHW")
    ) + p["b1"][None, :, None, None]
    y = lrelu(y)
    y = jax.lax.reduce_window(y, -jnp.inf, jax.lax.max, (1, 1, 2, 2), (1, 1, 2, 2), "VALID")
    y = jax.lax.conv_general_dilated(
        y, p["w2"], (1, 1), "VALID", dimension_numbers=("NCHW", "OIHW", "NCHW")
    ) + p["b2"][None, :, None, None]
    y = lrelu(y)
    y = jax.lax.reduce_window(y, -jnp.inf, jax.lax.max, (1, 1, 2, 2), (1, 1, 2, 2), "VALID")
    y = y.reshape(1, 256)
    y = lrelu(y @ p["w_fc1"].T + p["b_fc1"])
    y = lrelu(y @ p["w_fc2"].T + p["b_fc2"])
    return y @ p["w_fc3"].T + p["b_fc3"]


def init_params(key):
    ks = jax.random.split(key, 10)
    return {
        "w1": jax.random.normal(ks[0], (6, 1, 5, 5), jnp.float32) * 0.1,
        "b1": jax.random.normal(ks[1], (6,), jnp.float32) * 0.1,
        "w2": jax.random.normal(ks[2], (16, 6, 5, 5), jnp.float32) * 0.1,
        "b2": jax.random.normal(ks[3], (16,), jnp.float32) * 0.1,
        "w_fc1": jax.random.normal(ks[4], (128, 256), jnp.float32) * 0.05,
        "b_fc1": jax.random.normal(ks[5], (128,), jnp.float32) * 0.05,
        "w_fc2": jax.random.normal(ks[6], (128, 128), jnp.float32) * 0.05,
        "b_fc2": jax.random.normal(ks[7], (128,), jnp.float32) * 0.05,
        "w_fc3": jax.random.normal(ks[8], (10, 128), jnp.float32) * 0.05,
        "b_fc3": jax.random.normal(ks[9], (10,), jnp.float32) * 0.05,
    }


if __name__ == "__main__":
    key = jax.random.PRNGKey(0)
    pkey, xkey = jax.random.split(key)
    params = init_params(pkey)
    prep = prepare_params(params)                         # one-time weight packing
    x = jax.random.normal(xkey, (1, 28, 28), jnp.float32)  # module views to (1,28,28)

    out = cnn_forward(x, prep)
    out = jax.block_until_ready(out)
    assert out.shape == (1, 10) and out.dtype == jnp.float32

    ref = reference_forward(x, params)
    np.testing.assert_allclose(np.asarray(out), np.asarray(ref), rtol=1e-3, atol=1e-3)

    print("KERNEL_OK")
</pallas_src>

<mosaic_0001>
module attributes {stable_mosaic.version = 11 : i64} {
  func.func @_cnn_kernel(%arg0: memref<14x56xf32, #tpu.memory_space<vmem>>, %arg1: memref<3x56x512xf32, #tpu.memory_space<vmem>>, %arg2: memref<1x128xf32, #tpu.memory_space<vmem>>, %arg3: memref<5x128x256xf32, #tpu.memory_space<vmem>>, %arg4: memref<1x128xf32, #tpu.memory_space<vmem>>, %arg5: memref<4x128x128xf32, #tpu.memory_space<vmem>>, %arg6: memref<1x128xf32, #tpu.memory_space<vmem>>, %arg7: memref<128x128xf32, #tpu.memory_space<vmem>>, %arg8: memref<1x128xf32, #tpu.memory_space<vmem>>, %arg9: memref<128x10xf32, #tpu.memory_space<vmem>>, %arg10: memref<1x10xf32, #tpu.memory_space<vmem>>, %arg11: memref<1x10xf32, #tpu.memory_space<vmem>>) attributes {dimension_semantics = [], scalar_prefetch = 0 : i64, scratch_operands = 0 : i64, tpu.core_type = #tpu.core_type<tc>} {
    %c0 = arith.constant 0 : index
    %c0_0 = arith.constant 0 : index
    %0 = vector.load %arg0[%c0, %c0_0] : memref<14x56xf32, #tpu.memory_space<vmem>>, vector<14x56xf32>
    %1 = vector.extract_strided_slice %0 {offsets = [0, 0], sizes = [12, 56], strides = [1, 1]} : vector<14x56xf32> to vector<12x56xf32>
    %c0_1 = arith.constant 0 : index
    %c0_2 = arith.constant 0 : index
    %c0_3 = arith.constant 0 : index
    %2 = vector.load %arg1[%c0_1, %c0_2, %c0_3] : memref<3x56x512xf32, #tpu.memory_space<vmem>>, vector<1x56x512xf32>
    %3 = vector.shape_cast %2 : vector<1x56x512xf32> to vector<56x512xf32>
    %cst = arith.constant dense<0.000000e+00> : vector<12x512xf32>
    %4 = tpu.matmul %1, %3, %cst {dimension_numbers = #tpu.dot_dimension_numbers<[1], [0], [0], [1], [0, 0, 1, 1], [], []>} : vector<12x56xf32>, vector<56x512xf32>, vector<12x512xf32> -> vector<12x512xf32>
    %5 = vector.extract_strided_slice %0 {offsets = [1, 0], sizes = [12, 56], strides = [1, 1]} : vector<14x56xf32> to vector<12x56xf32>
    %c1 = arith.constant 1 : index
    %c0_4 = arith.constant 0 : index
    %c0_5 = arith.constant 0 : index
    %6 = vector.load %arg1[%c1, %c0_4, %c0_5] : memref<3x56x512xf32, #tpu.memory_space<vmem>>, vector<1x56x512xf32>
    %7 = vector.shape_cast %6 : vector<1x56x512xf32> to vector<56x512xf32>
    %cst_6 = arith.constant dense<0.000000e+00> : vector<12x512xf32>
    %8 = tpu.matmul %5, %7, %cst_6 {dimension_numbers = #tpu.dot_dimension_numbers<[1], [0], [0], [1], [0, 0, 1, 1], [], []>} : vector<12x56xf32>, vector<56x512xf32>, vector<12x512xf32> -> vector<12x512xf32>
    %9 = arith.addf %4, %8 : vector<12x512xf32>
    %10 = vector.extract_strided_slice %0 {offsets = [2, 0], sizes = [12, 56], strides = [1, 1]} : vector<14x56xf32> to vector<12x56xf32>
    %c2 = arith.constant 2 : index
    %c0_7 = arith.constant 0 : index
    %c0_8 = arith.constant 0 : index
    %11 = vector.load %arg1[%c2, %c0_7, %c0_8] : memref<3x56x512xf32, #tpu.memory_space<vmem>>, vector<1x56x512xf32>
    %12 = vector.shape_cast %11 : vector<1x56x512xf32> to vector<56x512xf32>
    %cst_9 = arith.constant dense<0.000000e+00> : vector<12x512xf32>
    %13 = tpu.matmul %10, %12, %cst_9 {dimension_numbers = #tpu.dot_dimension_numbers<[1], [0], [0], [1], [0, 0, 1, 1], [], []>} : vector<12x56xf32>, vector<56x512xf32>, vector<12x512xf32> -> vector<12x512xf32>
    %14 = arith.addf %9, %13 : vector<12x512xf32>
    %15 = vector.extract_strided_slice %14 {offsets = [0, 0], sizes = [12, 128], strides = [1, 1]} : vector<12x512xf32> to vector<12x128xf32>
    %16 = vector.extract_strided_slice %14 {offsets = [0, 128], sizes = [12, 128], strides = [1, 1]} : vector<12x512xf32> to vector<12x128xf32>
    %17 = arith.maximumf %15, %16 : vector<12x128xf32>
    %18 = vector.extract_strided_slice %14 {offsets = [0, 256], sizes = [12, 128], strides = [1, 1]} : vector<12x512xf32> to vector<12x128xf32>
    %19 = vector.extract_strided_slice %14 {offsets = [0, 384], sizes = [12, 128], strides = [1, 1]} : vector<12x512xf32> to vector<12x128xf32>
    %20 = arith.maximumf %18, %19 : vector<12x128xf32>
    %21 = arith.maximumf %17, %20 : vector<12x128xf32>
    %c0_10 = arith.constant 0 : index
    %c0_11 = arith.constant 0 : index
    %22 = vector.load %arg2[%c0_10, %c0_11] : memref<1x128xf32, #tpu.memory_space<vmem>>, vector<1x128xf32>
    %23 = vector.broadcast %22 : vector<1x128xf32> to vector<12x128xf32>
    %24 = arith.addf %21, %23 : vector<12x128xf32>
    %cst_12 = arith.constant 0.000000e+00 : f32
    %25 = vector.broadcast %cst_12 : f32 to vector<12x128xf32>
    %26 = arith.cmpf ogt, %24, %25 : vector<12x128xf32>
    %cst_13 = arith.constant 0.00999999977 : f32
    %27 = vector.broadcast %cst_13 : f32 to vector<12x128xf32>
    %28 = arith.mulf %27, %24 : vector<12x128xf32>
    %29 = arith.select %26, %24, %28 : vector<12x128xi1>, vector<12x128xf32>
    %30 = vector.extract_strided_slice %29 {offsets = [0, 0], sizes = [8, 128], strides = [1, 1]} : vector<12x128xf32> to vector<8x128xf32>
    %c0_14 = arith.constant 0 : index
    %c0_15 = arith.constant 0 : index
    %c0_16 = arith.constant 0 : index
    %31 = vector.load %arg3[%c0_14, %c0_15, %c0_16] : memref<5x128x256xf32, #tpu.memory_space<vmem>>, vector<1x128x256xf32>
    %32 = vector.shape_cast %31 : vector<1x128x256xf32> to vector<128x256xf32>
    %cst_17 = arith.constant dense<0.000000e+00> : vector<8x256xf32>
    %33 = tpu.matmul %30, %32, %cst_17 {dimension_numbers = #tpu.dot_dimension_numbers<[1], [0], [0], [1], [0, 0, 1, 1], [], []>} : vector<8x128xf32>, vector<128x256xf32>, vector<8x256xf32> -> vector<8x256xf32>
    %34 = vector.extract_strided_slice %29 {offsets = [1, 0], sizes = [8, 128], strides = [1, 1]} : vector<12x128xf32> to vector<8x128xf32>
    %c1_18 = arith.constant 1 : index
    %c0_19 = arith.constant 0 : index
    %c0_20 = arith.constant 0 : index
    %35 = vector.load %arg3[%c1_18, %c0_19, %c0_20] : memref<5x128x256xf32, #tpu.memory_space<vmem>>, vector<1x128x256xf32>
    %36 = vector.shape_cast %35 : vector<1x128x256xf32> to vector<128x256xf32>
    %cst_21 = arith.constant dense<0.000000e+00> : vector<8x256xf32>
    %37 = tpu.matmul %34, %36, %cst_21 {dimension_numbers = #tpu.dot_dimension_numbers<[1], [0], [0], [1], [0, 0, 1, 1], [], []>} : vector<8x128xf32>, vector<128x256xf32>, vector<8x256xf32> -> vector<8x256xf32>
    %38 = arith.addf %33, %37 : vector<8x256xf32>
    %39 = vector.extract_strided_slice %29 {offsets = [2, 0], sizes = [8, 128], strides = [1, 1]} : vector<12x128xf32> to vector<8x128xf32>
    %c2_22 = arith.constant 2 : index
    %c0_23 = arith.constant 0 : index
    %c0_24 = arith.constant 0 : index
    %40 = vector.load %arg3[%c2_22, %c0_23, %c0_24] : memref<5x128x256xf32, #tpu.memory_space<vmem>>, vector<1x128x256xf32>
    %41 = vector.shape_cast %40 : vector<1x128x256xf32> to vector<128x256xf32>
    %cst_25 = arith.constant dense<0.000000e+00> : vector<8x256xf32>
    %42 = tpu.matmul %39, %41, %cst_25 {dimension_numbers = #tpu.dot_dimension_numbers<[1], [0], [0], [1], [0, 0, 1, 1], [], []>} : vector<8x128xf32>, vector<128x256xf32>, vector<8x256xf32> -> vector<8x256xf32>
    %43 = arith.addf %38, %42 : vector<8x256xf32>
    %44 = vector.extract_strided_slice %29 {offsets = [3, 0], sizes = [8, 128], strides = [1, 1]} : vector<12x128xf32> to vector<8x128xf32>
    %c3 = arith.constant 3 : index
    %c0_26 = arith.constant 0 : index
    %c0_27 = arith.constant 0 : index
    %45 = vector.load %arg3[%c3, %c0_26, %c0_27] : memref<5x128x256xf32, #tpu.memory_space<vmem>>, vector<1x128x256xf32>
    %46 = vector.shape_cast %45 : vector<1x128x256xf32> to vector<128x256xf32>
    %cst_28 = arith.constant dense<0.000000e+00> : vector<8x256xf32>
    %47 = tpu.matmul %44, %46, %cst_28 {dimension_numbers = #tpu.dot_dimension_numbers<[1], [0], [0], [1], [0, 0, 1, 1], [], []>} : vector<8x128xf32>, vector<128x256xf32>, vector<8x256xf32> -> vector<8x256xf32>
    %48 = arith.addf %43, %47 : vector<8x256xf32>
    %49 = vector.extract_strided_slice %29 {offsets = [4, 0], sizes = [8, 128], strides = [1, 1]} : vector<12x128xf32> to vector<8x128xf32>
    %c4 = arith.constant 4 : index
    %c0_29 = arith.constant 0 : index
    %c0_30 = arith.constant 0 : index
    %50 = vector.load %arg3[%c4, %c0_29, %c0_30] : memref<5x128x256xf32, #tpu.memory_space<vmem>>, vector<1x128x256xf32>
    %51 = vector.shape_cast %50 : vector<1x128x256xf32> to vector<128x256xf32>
    %cst_31 = arith.constant dense<0.000000e+00> : vector<8x256xf32>
    %52 = tpu.matmul %49, %51, %cst_31 {dimension_numbers = #tpu.dot_dimension_numbers<[1], [0], [0], [1], [0, 0, 1, 1], [], []>} : vector<8x128xf32>, vector<128x256xf32>, vector<8x256xf32> -> vector<8x256xf32>
    %53 = arith.addf %48, %52 : vector<8x256xf32>
    %54 = vector.extract_strided_slice %53 {offsets = [0, 0], sizes = [8, 128], strides = [1, 1]} : vector<8x256xf32> to vector<8x128xf32>
    %55 = vector.extract_strided_slice %53 {offsets = [0, 128], sizes = [8, 128], strides = [1, 1]} : vector<8x256xf32> to vector<8x128xf32>
    %56 = arith.maximumf %54, %55 : vector<8x128xf32>
    %c0_32 = arith.constant 0 : index
    %c0_33 = arith.constant 0 : index
    %57 = vector.load %arg4[%c0_32, %c0_33] : memref<1x128xf32, #tpu.memory_space<vmem>>, vector<1x128xf32>
    %58 = vector.broadcast %57 : vector<1x128xf32> to vector<8x128xf32>
    %59 = arith.addf %56, %58 : vector<8x128xf32>
    %cst_34 = arith.constant 0.000000e+00 : f32
    %60 = vector.broadcast %cst_34 : f32 to vector<8x128xf32>
    %61 = arith.cmpf ogt, %59, %60 : vector<8x128xf32>
    %cst_35 = arith.constant 0.00999999977 : f32
    %62 = vector.broadcast %cst_35 : f32 to vector<8x128xf32>
    %63 = arith.mulf %62, %59 : vector<8x128xf32>
    %64 = arith.select %61, %59, %63 : vector<8x128xi1>, vector<8x128xf32>
    %c0_36 = arith.constant 0 : index
    %c0_37 = arith.constant 0 : index
    %65 = vector.load %arg6[%c0_36, %c0_37] : memref<1x128xf32, #tpu.memory_space<vmem>>, vector<1x128xf32>
    %66 = vector.extract_strided_slice %64 {offsets = [0, 0], sizes = [1, 128], strides = [1, 1]} : vector<8x128xf32> to vector<1x128xf32>
    %67 = vector.extract_strided_slice %64 {offsets = [1, 0], sizes = [1, 128], strides = [1, 1]} : vector<8x128xf32> to vector<1x128xf32>
    %68 = arith.maximumf %66, %67 : vector<1x128xf32>
    %c0_38 = arith.constant 0 : index
    %c0_39 = arith.constant 0 : index
    %c0_40 = arith.constant 0 : index
    %69 = vector.load %arg5[%c0_38, %c0_39, %c0_40] : memref<4x128x128xf32, #tpu.memory_space<vmem>>, vector<1x128x128xf32>
    %70 = vector.shape_cast %69 : vector<1x128x128xf32> to vector<128x128xf32>
    %cst_41 = arith.constant dense<0.000000e+00> : vector<1x128xf32>
    %71 = tpu.matmul %68, %70, %cst_41 {dimension_numbers = #tpu.dot_dimension_numbers<[1], [0], [0], [1], [0, 0, 1, 1], [], []>} : vector<1x128xf32>, vector<128x128xf32>, vector<1x128xf32> -> vector<1x128xf32>
    %72 = arith.addf %65, %71 : vector<1x128xf32>
    %73 = vector.extract_strided_slice %64 {offsets = [2, 0], sizes = [1, 128], strides = [1, 1]} : vector<8x128xf32> to vector<1x128xf32>
    %74 = vector.extract_strided_slice %64 {offsets = [3, 0], sizes = [1, 128], strides = [1, 1]} : vector<8x128xf32> to vector<1x128xf32>
    %75 = arith.maximumf %73, %74 : vector<1x128xf32>
    %c1_42 = arith.constant 1 : index
    %c0_43 = arith.constant 0 : index
    %c0_44 = arith.constant 0 : index
    %76 = vector.load %arg5[%c1_42, %c0_43, %c0_44] : memref<4x128x128xf32, #tpu.memory_space<vmem>>, vector<1x128x128xf32>
    %77 = vector.shape_cast %76 : vector<1x128x128xf32> to vector<128x128xf32>
    %cst_45 = arith.constant dense<0.000000e+00> : vector<1x128xf32>
    %78 = tpu.matmul %75, %77, %cst_45 {dimension_numbers = #tpu.dot_dimension_numbers<[1], [0], [0], [1], [0, 0, 1, 1], [], []>} : vector<1x128xf32>, vector<128x128xf32>, vector<1x128xf32> -> vector<1x128xf32>
    %79 = arith.addf %72, %78 : vector<1x128xf32>
    %80 = vector.extract_strided_slice %64 {offsets = [4, 0], sizes = [1, 128], strides = [1, 1]} : vector<8x128xf32> to vector<1x128xf32>
    %81 = vector.extract_strided_slice %64 {offsets = [5, 0], sizes = [1, 128], strides = [1, 1]} : vector<8x128xf32> to vector<1x128xf32>
    %82 = arith.maximumf %80, %81 : vector<1x128xf32>
    %c2_46 = arith.constant 2 : index
    %c0_47 = arith.constant 0 : index
    %c0_48 = arith.constant 0 : index
    %83 = vector.load %arg5[%c2_46, %c0_47, %c0_48] : memref<4x128x128xf32, #tpu.memory_space<vmem>>, vector<1x128x128xf32>
    %84 = vector.shape_cast %83 : vector<1x128x128xf32> to vector<128x128xf32>
    %cst_49 = arith.constant dense<0.000000e+00> : vector<1x128xf32>
    %85 = tpu.matmul %82, %84, %cst_49 {dimension_numbers = #tpu.dot_dimension_numbers<[1], [0], [0], [1], [0, 0, 1, 1], [], []>} : vector<1x128xf32>, vector<128x128xf32>, vector<1x128xf32> -> vector<1x128xf32>
    %86 = arith.addf %79, %85 : vector<1x128xf32>
    %87 = vector.extract_strided_slice %64 {offsets = [6, 0], sizes = [1, 128], strides = [1, 1]} : vector<8x128xf32> to vector<1x128xf32>
    %88 = vector.extract_strided_slice %64 {offsets = [7, 0], sizes = [1, 128], strides = [1, 1]} : vector<8x128xf32> to vector<1x128xf32>
    %89 = arith.maximumf %87, %88 : vector<1x128xf32>
    %c3_50 = arith.constant 3 : index
    %c0_51 = arith.constant 0 : index
    %c0_52 = arith.constant 0 : index
    %90 = vector.load %arg5[%c3_50, %c0_51, %c0_52] : memref<4x128x128xf32, #tpu.memory_space<vmem>>, vector<1x128x128xf32>
    %91 = vector.shape_cast %90 : vector<1x128x128xf32> to vector<128x128xf32>
    %cst_53 = arith.constant dense<0.000000e+00> : vector<1x128xf32>
    %92 = tpu.matmul %89, %91, %cst_53 {dimension_numbers = #tpu.dot_dimension_numbers<[1], [0], [0], [1], [0, 0, 1, 1], [], []>} : vector<1x128xf32>, vector<128x128xf32>, vector<1x128xf32> -> vector<1x128xf32>
    %93 = arith.addf %86, %92 : vector<1x128xf32>
    %cst_54 = arith.constant 0.000000e+00 : f32
    %94 = vector.broadcast %cst_54 : f32 to vector<1x128xf32>
    %95 = arith.cmpf ogt, %93, %94 : vector<1x128xf32>
    %cst_55 = arith.constant 0.00999999977 : f32
    %96 = vector.broadcast %cst_55 : f32 to vector<1x128xf32>
    %97 = arith.mulf %96, %93 : vector<1x128xf32>
    %98 = arith.select %95, %93, %97 : vector<1x128xi1>, vector<1x128xf32>
    %c0_56 = arith.constant 0 : index
    %c0_57 = arith.constant 0 : index
    %99 = vector.load %arg7[%c0_56, %c0_57] : memref<128x128xf32, #tpu.memory_space<vmem>>, vector<128x128xf32>
    %cst_58 = arith.constant dense<0.000000e+00> : vector<1x128xf32>
    %100 = tpu.matmul %98, %99, %cst_58 {dimension_numbers = #tpu.dot_dimension_numbers<[1], [0], [0], [1], [0, 0, 1, 1], [], []>} : vector<1x128xf32>, vector<128x128xf32>, vector<1x128xf32> -> vector<1x128xf32>
    %c0_59 = arith.constant 0 : index
    %c0_60 = arith.constant 0 : index
    %101 = vector.load %arg8[%c0_59, %c0_60] : memref<1x128xf32, #tpu.memory_space<vmem>>, vector<1x128xf32>
    %102 = arith.addf %100, %101 : vector<1x128xf32>
    %cst_61 = arith.constant 0.000000e+00 : f32
    %103 = vector.broadcast %cst_61 : f32 to vector<1x128xf32>
    %104 = arith.cmpf ogt, %102, %103 : vector<1x128xf32>
    %cst_62 = arith.constant 0.00999999977 : f32
    %105 = vector.broadcast %cst_62 : f32 to vector<1x128xf32>
    %106 = arith.mulf %105, %102 : vector<1x128xf32>
    %107 = arith.select %104, %102, %106 : vector<1x128xi1>, vector<1x128xf32>
    %c0_63 = arith.constant 0 : index
    %c0_64 = arith.constant 0 : index
    %108 = vector.load %arg9[%c0_63, %c0_64] : memref<128x10xf32, #tpu.memory_space<vmem>>, vector<128x10xf32>
    %cst_65 = arith.constant dense<0.000000e+00> : vector<1x10xf32>
    %109 = tpu.matmul %107, %108, %cst_65 {dimension_numbers = #tpu.dot_dimension_numbers<[1], [0], [0], [1], [0, 0, 1, 1], [], []>} : vector<1x128xf32>, vector<128x10xf32>, vector<1x10xf32> -> vector<1x10xf32>
    %c0_66 = arith.constant 0 : index
    %c0_67 = arith.constant 0 : index
    %110 = vector.load %arg10[%c0_66, %c0_67] : memref<1x10xf32, #tpu.memory_space<vmem>>, vector<1x10xf32>
    %111 = arith.addf %109, %110 : vector<1x10xf32>
    %c0_68 = arith.constant 0 : index
    %c0_69 = arith.constant 0 : index
    %112 = vector.load %arg11[%c0_68, %c0_69] : memref<1x10xf32, #tpu.memory_space<vmem>>, vector<1x10xf32>
    tpu.vector_store %arg11[%c0_68, %c0_69], %111 {strides = array<i32>} : memref<1x10xf32, #tpu.memory_space<vmem>>, vector<1x10xf32>,
    return
  }
}

</mosaic_0001>

<llo_original>
// kernel: cnn_forward.1
$region0: #{cnn_forward.1}
  #allocation0 [shape = 'u32[]', space=smem, size = 0x4, offset = 0x4, fixed_abs, tag = 'smem constant byte address 0x4 - core index']
  #allocation1 [shape = 'u32[144,128]{1,0:T(1,128)}', space=vmem, size = 0x12000, scoped, tag = 'internal scratch']
  %s0 = inlined_call_operand.vmem [shape: f32[14,56], index: 0, kind: input, shape index: {}]
  %s1 = inlined_call_operand.hbm [shape: f32[3,56,512], index: 1, kind: input, shape index: {}]
  %s2 = inlined_call_operand.vmem [shape: f32[1,128], index: 2, kind: input, shape index: {}]
  %s3 = inlined_call_operand.hbm [shape: f32[5,128,256], index: 3, kind: input, shape index: {}]
  %s4 = inlined_call_operand.vmem [shape: f32[1,128], index: 4, kind: input, shape index: {}]
  %s5 = inlined_call_operand.hbm [shape: f32[4,128,128], index: 5, kind: input, shape index: {}]
  %s6 = inlined_call_operand.vmem [shape: f32[1,128], index: 6, kind: input, shape index: {}]
  %s7 = inlined_call_operand.vmem [shape: f32[128,128], index: 7, kind: input, shape index: {}]
  %s8 = inlined_call_operand.vmem [shape: f32[1,128], index: 8, kind: input, shape index: {}]
  %s9 = inlined_call_operand.vmem [shape: f32[128,10], index: 9, kind: input, shape index: {}]
  %s10 = inlined_call_operand.vmem [shape: f32[1,10], index: 10, kind: input, shape index: {}]
  %s11 = inlined_call_operand.hbm [shape: f32[1,10], index: 11, kind: output, shape index: {}]
  %s12 = sld [smem:[#allocation0]]
  $region66: #{cnn_forward.1} parent=0
    _
  %s14 = ssub.s32 1, %s12
  %s15 = scalar_select 0, %s14, %s12
  $region1: #{cnn_forward.1} parent=0
    #allocation2 [shape = 'u8[344064]{0}', space=vmem, size = 0x54000, scoped, tag = 'input window, operand 1, single buffered']
    #allocation3 [shape = 's32[1]{0}', space=sflag, size = 0x4, scoped, tag = 'scoped memory for cnn_forward.1']
    #allocation4 [shape = 's32[1]{0}', space=sflag, size = 0x4, scoped, tag = 'scoped memory for cnn_forward.1']
    #allocation5 [shape = 'u8[655360]{0}', space=vmem, size = 0xa0000, scoped, tag = 'input window, operand 3, single buffered']
    #allocation6 [shape = 's32[1]{0}', space=sflag, size = 0x4, scoped, tag = 'scoped memory for cnn_forward.1']
    #allocation7 [shape = 'u8[262144]{0}', space=vmem, size = 0x40000, scoped, tag = 'input window, operand 5, single buffered']
    #allocation8 [shape = 'u8[512]{0}', space=vmem, size = 0x400, scoped, tag = 'output window, operand 0, single buffered']
    %16 = vsyncpa [#allocation3], 0
    %17 = vsyncpa [#allocation6], 0
    %18 = vsyncpa [#allocation4], 0
    // Predicated region
    $region2: #{cnn_forward.1} parent=1 // pred_check
      _
    $region3: #{cnn_forward.1} parent=1 // pred_check_branch
      %20 = sbr.rel (0) target = $region5
    $region4: #{cnn_forward.1} parent=1 // pred_region
      _
    $region5: #{cnn_forward.1} parent=1 // pred_fallthru
      _
    // Predicated region
    $region6: #{cnn_forward.1} parent=1 // pred_check
      _
    $region7: #{cnn_forward.1} parent=1 // pred_check_branch
      %22 = sbr.rel (0) target = $region9
    $region8: #{cnn_forward.1} parent=1 // pred_region
      %s24 = ssub.s32 10752, 10752
      %25 = vsyncadd [#allocation3], %s24
      %s26 = sshll.u32 [#allocation2], 4
      %s27 = int_to_ptr.vmem [resolvable:$true] %s26
      %32 = dma.hbm_to_vmem [thread:$0]  %s1, 10752, %s27, [#allocation3], 512, 512, 32
    $region9: #{cnn_forward.1} parent=1 // pred_fallthru
      _
    // Predicated region
    $region10: #{cnn_forward.1} parent=1 // pred_check
      _
    $region11: #{cnn_forward.1} parent=1 // pred_check_branch
      %34 = sbr.rel (0) target = $region13
    $region12: #{cnn_forward.1} parent=1 // pred_region
      _
    $region13: #{cnn_forward.1} parent=1 // pred_fallthru
      _
    // Predicated region
    $region14: #{cnn_forward.1} parent=1 // pred_check
      _
    $region15: #{cnn_forward.1} parent=1 // pred_check_branch
      %36 = sbr.rel (0) target = $region17
    $region16: #{cnn_forward.1} parent=1 // pred_region
      %s38 = ssub.s32 20480, 20480
      %39 = vsyncadd [#allocation6], %s38
      %s40 = sshll.u32 [#allocation5], 4
      %s41 = int_to_ptr.vmem [resolvable:$true] %s40
      %46 = dma.hbm_to_vmem [thread:$0]  %s3, 20480, %s41, [#allocation6], 256, 256, 16
    $region17: #{cnn_forward.1} parent=1 // pred_fallthru
      _
    // Predicated region
    $region18: #{cnn_forward.1} parent=1 // pred_check
      _
    $region19: #{cnn_forward.1} parent=1 // pred_check_branch
      %48 = sbr.rel (0) target = $region21
    $region20: #{cnn_forward.1} parent=1 // pred_region
      _
    $region21: #{cnn_forward.1} parent=1 // pred_fallthru
      _
    // Predicated region
    $region22: #{cnn_forward.1} parent=1 // pred_check
      _
    $region23: #{cnn_forward.1} parent=1 // pred_check_branch
      %50 = sbr.rel (0) target = $region25
    $region24: #{cnn_forward.1} parent=1 // pred_region
      %s52 = ssub.s32 8192, 8192
      %53 = vsyncadd [#allocation6], %s52
      %s54 = sshll.u32 [#allocation7], 4
      %s55 = int_to_ptr.vmem [resolvable:$true] %s54
      %60 = dma.hbm_to_vmem [thread:$0]  %s5, 8192, %s55, [#allocation6], 128, 128, 8
    $region25: #{cnn_forward.1} parent=1 // pred_fallthru
      _
    // Predicated region
    $region26: #{cnn_forward.1} parent=1 // pred_check
      _
    $region27: #{cnn_forward.1} parent=1 // pred_check_branch
      %62 = sbr.rel (0) target = $region29
    $region28: #{cnn_forward.1} parent=1 // pred_region
      _
    $region29: #{cnn_forward.1} parent=1 // pred_fallthru
      _
    // Predicated region
    $region30: #{cnn_forward.1} parent=1 // pred_check
      _
    $region31: #{cnn_forward.1} parent=1 // pred_check_branch
      %64 = sbr.rel (0) target = $region33
    $region32: #{cnn_forward.1} parent=1 // pred_region
      _
    $region33: #{cnn_forward.1} parent=1 // pred_fallthru
      _
    // Predicated region
    $region34: #{cnn_forward.1} parent=1 // pred_check
      _
    $region35: #{cnn_forward.1} parent=1 // pred_check_branch
      %66 = sbr.rel (0) target = $region37
    $region36: #{cnn_forward.1} parent=1 // pred_region
      _
    $region37: #{cnn_forward.1} parent=1 // pred_fallthru
      _
    // Predicated region
    $region38: #{cnn_forward.1} parent=1 // pred_check
      _
    $region39: #{cnn_forward.1} parent=1 // pred_check_branch
      %68 = sbr.rel (0) target = $region41
    $region40: #{cnn_forward.1} parent=1 // pred_region
      _
    $region41: #{cnn_forward.1} parent=1 // pred_fallthru
      _
    // Predicated region
    $region42: #{cnn_forward.1} parent=1 // pred_check
      _
    $region43: #{cnn_forward.1} parent=1 // pred_check_branch
      %70 = sbr.rel (0) target = $region45
    $region44: #{cnn_forward.1} parent=1 // pred_region
      _
    $region45: #{cnn_forward.1} parent=1 // pred_fallthru
      _
    // Predicated region
    $region46: #{cnn_forward.1} parent=1 // pred_check
      _
    $region47: #{cnn_forward.1} parent=1 // pred_check_branch
      %72 = sbr.rel (0) target = $region49
    $region48: #{cnn_forward.1} parent=1 // pred_region
      %73 = dma.done [#allocation3], 10752
    $region49: #{cnn_forward.1} parent=1 // pred_fallthru
      _
    // Predicated region
    $region50: #{cnn_forward.1} parent=1 // pred_check
      _
    $region51: #{cnn_forward.1} parent=1 // pred_check_branch
      %75 = sbr.rel (0) target = $region53
    $region52: #{cnn_forward.1} parent=1 // pred_region
      %76 = dma.done [#allocation6], 20480
    $region53: #{cnn_forward.1} parent=1 // pred_fallthru
      _
    // Predicated region
    $region54: #{cnn_forward.1} parent=1 // pred_check
      _
    $region55: #{cnn_forward.1} parent=1 // pred_check_branch
      %78 = sbr.rel (0) target = $region57
    $region56: #{cnn_forward.1} parent=1 // pred_region
      %79 = dma.done [#allocation6], 8192
    $region57: #{cnn_forward.1} parent=1 // pred_fallthru
      _
    %v80 = vld [vmem:[%s0] sm:$0xff]
    %v81 = vld [vmem:[%s0 + $0x8] sm:$0x3f]
    %v82 = vld [vmem:[#allocation2] sm:$0xff]
    %v83 = vld [vmem:[#allocation2 + $0x8] sm:$0xff]
    %v84 = vld [vmem:[#allocation2 + $0x10] sm:$0xff]
    %v85 = vld [vmem:[#allocation2 + $0x18] sm:$0xff]
    %v86 = vld [vmem:[#allocation2 + $0x20] sm:$0xff]
    %v87 = vld [vmem:[#allocation2 + $0x28] sm:$0xff]
    %v88 = vld [vmem:[#allocation2 + $0x30] sm:$0xff]
    %v89 = vld [vmem:[#allocation2 + $0x38] sm:$0xff]
    %v90 = vld [vmem:[#allocation2 + $0x40] sm:$0xff]
    %v91 = vld [vmem:[#allocation2 + $0x48] sm:$0xff]
    %v92 = vld [vmem:[#allocation2 + $0x50] sm:$0xff]
    %v93 = vld [vmem:[#allocation2 + $0x58] sm:$0xff]
    %v94 = vld [vmem:[#allocation2 + $0x60] sm:$0xff]
    %v95 = vld [vmem:[#allocation2 + $0x68] sm:$0xff]
    %v96 = vld [vmem:[#allocation2 + $0x70] sm:$0xff]
    %v97 = vld [vmem:[#allocation2 + $0x78] sm:$0xff]
    %v98 = vld [vmem:[#allocation2 + $0x80] sm:$0xff]
    %v99 = vld [vmem:[#allocation2 + $0x88] sm:$0xff]
    %v100 = vld [vmem:[#allocation2 + $0x90] sm:$0xff]
    %v101 = vld [vmem:[#allocation2 + $0x98] sm:$0xff]
    %v102 = vld [vmem:[#allocation2 + $0xa0] sm:$0xff]
    %v103 = vld [vmem:[#allocation2 + $0xa8] sm:$0xff]
    %v104 = vld [vmem:[#allocation2 + $0xb0] sm:$0xff]
    %v105 = vld [vmem:[#allocation2 + $0xb8] sm:$0xff]
    %v106 = vld [vmem:[#allocation2 + $0xc0] sm:$0xff]
    %v107 = vld [vmem:[#allocation2 + $0xc8] sm:$0xff]
    %v108 = vld [vmem:[#allocation2 + $0xd0] sm:$0xff]
    %v109 = vld [vmem:[#allocation2 + $0xd8] sm:$0xff]
    %s110 = scalar_lea.vmem [#allocation2], 224
    %v111 = vld [vmem:[%s110] sm:$0xff]
    %v112 = vld [vmem:[%s110 + $0x8] sm:$0xff]
    %v113 = vld [vmem:[%s110 + $0x10] sm:$0xff]
    %v114 = vld [vmem:[%s110 + $0x18] sm:$0xff]
    %v115 = vld [vmem:[%s110 + $0x20] sm:$0xff]
    %v116 = vld [vmem:[%s110 + $0x28] sm:$0xff]
    %v117 = vld [vmem:[%s110 + $0x30] sm:$0xff]
    %v118 = vld [vmem:[%s110 + $0x38] sm:$0xff]
    %v119 = vld [vmem:[%s110 + $0x40] sm:$0xff]
    %v120 = vld [vmem:[%s110 + $0x48] sm:$0xff]
    %v121 = vld [vmem:[%s110 + $0x50] sm:$0xff]
    %v122 = vld [vmem:[%s110 + $0x58] sm:$0xff]
    %v123 = vld [vmem:[%s110 + $0x60] sm:$0xff]
    %v124 = vld [vmem:[%s110 + $0x68] sm:$0xff]
    %v125 = vld [vmem:[%s110 + $0x70] sm:$0xff]
    %v126 = vld [vmem:[%s110 + $0x78] sm:$0xff]
    %v127 = vld [vmem:[%s110 + $0x80] sm:$0xff]
    %v128 = vld [vmem:[%s110 + $0x88] sm:$0xff]
    %v129 = vld [vmem:[%s110 + $0x90] sm:$0xff]
    %v130 = vld [vmem:[%s110 + $0x98] sm:$0xff]
    %v131 = vld [vmem:[%s110 + $0xa0] sm:$0xff]
    %v132 = vld [vmem:[%s110 + $0xa8] sm:$0xff]
    %v133 = vld [vmem:[%s110 + $0xb0] sm:$0xff]
    %v134 = vld [vmem:[%s110 + $0xb8] sm:$0xff]
    %v135 = vld [vmem:[%s110 + $0xc0] sm:$0xff]
    %v136 = vld [vmem:[%s110 + $0xc8] sm:$0xff]
    %v137 = vld [vmem:[%s110 + $0xd0] sm:$0xff]
    %v138 = vld [vmem:[%s110 + $0xd8] sm:$0xff]
    %vm141 = vcmask 1046528
    %v142 = vrot.slane %v80, 1
    %v143 = vrot.slane %v81, 1
    %v144 = vsel %vm141, %v142, %v143
    %vm145 = vcmask 457728
    %v146 = vsel %vm145, %v144, 0
    %v148 = vsel %vm145, %v143, 0
    %150 = vmatprep.subr.mxu0 %v112
    %151 = vmatpush1.msra.mxu0 %v111
    %152 = vmatprep.subr.mxu0 %v116
    %153 = vmatpush1.msra.mxu0 %v115
    %154 = vmatprep.subr.mxu0 %v120
    %155 = vmatpush1.msra.mxu0 %v119
    %156 = vmatprep.subr.mxu0 %v124
    %157 = vmatpush1.msra.mxu0 %v123
    %158 = vmatprep.subr.mxu0 %v128
    %159 = vmatpush1.msra.mxu0 %v127
    %160 = vmatprep.subr.mxu0 %v132
    %161 = vmatpush1.msra.mxu0 %v131
    %162 = vmatprep.subr.mxu0 %v136
    %163 = vmatpush1.msra.mxu0 %v135
    %164 = vmatprep.subr.mxu0 0.0
    %165 = vmatpush1.msra.mxu0 0.0
    %166 = vmatprep.subr.mxu0 0.0
    %167 = vmatpush1.msra.mxu0 0.0
    %168 = vmatprep.subr.mxu0 0.0
    %169 = vmatpush1.msra.mxu0 0.0
    %170 = vmatprep.subr.mxu0 0.0
    %171 = vmatpush1.msra.mxu0 0.0
    %172 = vmatprep.subr.mxu0 0.0
    %173 = vmatpush1.msra.mxu0 0.0
    %174 = vmatprep.subr.mxu0 0.0
    %175 = vmatpush1.msra.mxu0 0.0
    %176 = vmatprep.subr.mxu0 0.0
    %177 = vmatpush1.msra.mxu0 0.0
    %178 = vmatprep.subr.mxu0 0.0
    %179 = vmatpush1.msra.mxu0 0.0
    %180 = vmatprep.subr.mxu0 0.0
    %181 = vmatpush1.msra.mxu0 0.0
    %182 = vmatprep.subr.mxu0 0.0
    %183 = vmatpush1.msra.mxu0 0.0
    %184 = vmatprep.subr.mxu0 0.0
    %185 = vmatpush1.msra.mxu0 0.0
    %186 = vmatprep.subr.mxu0 0.0
    %187 = vmatpush1.msra.mxu0 0.0
    %188 = vmatprep.subr.mxu0 0.0
    %189 = vmatpush1.msra.mxu0 0.0
    %190 = vmatprep.subr.mxu0 0.0
    %191 = vmatpush1.msra.mxu0 0.0
    %192 = vmatprep.subr.mxu0 0.0
    %193 = vmatpush1.msra.mxu0 0.0
    %194 = vmatprep.subr.mxu0 0.0
    %195 = vmatpush1.msra.mxu0 0.0
    %196 = vmatprep.subr.mxu0 0.0
    %197 = vmatpush1.msra.mxu0 0.0
    %198 = vmatprep.subr.mxu0 0.0
    %199 = vmatpush1.msra.mxu0 0.0
    %200 = vmatprep.subr.mxu0 0.0
    %201 = vmatpush1.msra.mxu0 0.0
    %202 = vmatprep.subr.mxu0 0.0
    %203 = vmatpush1.msra.mxu0 0.0
    %204 = vmatprep.subr.mxu0 0.0
    %205 = vmatpush1.msra.mxu0 0.0
    %206 = vmatprep.subr.mxu0 0.0
    %207 = vmatpush1.msra.mxu0 0.0
    %208 = vmatprep.subr.mxu0 0.0
    %209 = vmatpush1.msra.mxu0 0.0
    %210 = vmatprep.subr.mxu0 0.0
    %211 = vmatpush1.msra.mxu0 0.0
    %212 = vmatprep.subr.mxu0 0.0
    %213 = vmatpush1.msra.mxu0 0.0
    %214 = vmatprep.mubr.f32.mxu0 0.0
    %215 = vmatmul.mubr.f32.gmra.mrb[0].mxu0 %v146
    %v216 = vpop.f32.mrb[0].mxu0
    %v217 = vadd.f32 0.0, %v216
    %v218 = vpop.f32.mrb[0].mxu0
    %v219 = vadd.f32 0.0, %v218
    %220 = vmatprep.mubr.f32.mxu0 0.0
    %221 = vmatmul.mubr.f32.gmra.mrb[0].mxu0 %v148
    %v222 = vpop.f32.mrb[0].mxu0
    %v223 = vadd.f32 0.0, %v222
    %v224 = vpop.f32.mrb[0].mxu0
    %v225 = vadd.f32 0.0, %v224
    %226 = vdwg.mxu0
    %227 = vmatprep.subr.mxu0 %v114
    %228 = vmatpush1.msra.mxu0 %v113
    %229 = vmatprep.subr.mxu0 %v118
    %230 = vmatpush1.msra.mxu0 %v117
    %231 = vmatprep.subr.mxu0 %v122
    %232 = vmatpush1.msra.mxu0 %v121
    %233 = vmatprep.subr.mxu0 %v126
    %234 = vmatpush1.msra.mxu0 %v125
    %235 = vmatprep.subr.mxu0 %v130
    %236 = vmatpush1.msra.mxu0 %v129
    %237 = vmatprep.subr.mxu0 %v134
    %238 = vmatpush1.msra.mxu0 %v133
    %239 = vmatprep.subr.mxu0 %v138
    %240 = vmatpush1.msra.mxu0 %v137
    %241 = vmatprep.subr.mxu0 0.0
    %242 = vmatpush1.msra.mxu0 0.0
    %243 = vmatprep.subr.mxu0 0.0
    %244 = vmatpush1.msra.mxu0 0.0
    %245 = vmatprep.subr.mxu0 0.0
    %246 = vmatpush1.msra.mxu0 0.0
    %247 = vmatprep.subr.mxu0 0.0
    %248 = vmatpush1.msra.mxu0 0.0
    %249 = vmatprep.subr.mxu0 0.0
    %250 = vmatpush1.msra.mxu0 0.0
    %251 = vmatprep.subr.mxu0 0.0
    %252 = vmatpush1.msra.mxu0 0.0
    %253 = vmatprep.subr.mxu0 0.0
    %254 = vmatpush1.msra.mxu0 0.0
    %255 = vmatprep.subr.mxu0 0.0
    %256 = vmatpush1.msra.mxu0 0.0
    %257 = vmatprep.subr.mxu0 0.0
    %258 = vmatpush1.msra.mxu0 0.0
    %259 = vmatprep.subr.mxu0 0.0
    %260 = vmatpush1.msra.mxu0 0.0
    %261 = vmatprep.subr.mxu0 0.0
    %262 = vmatpush1.msra.mxu0 0.0
    %263 = vmatprep.subr.mxu0 0.0
    %264 = vmatpush1.msra.mxu0 0.0
    %265 = vmatprep.subr.mxu0 0.0
    %266 = vmatpush1.msra.mxu0 0.0
    %267 = vmatprep.subr.mxu0 0.0
    %268 = vmatpush1.msra.mxu0 0.0
    %269 = vmatprep.subr.mxu0 0.0
    %270 = vmatpush1.msra.mxu0 0.0
    %271 = vmatprep.subr.mxu0 0.0
    %272 = vmatpush1.msra.mxu0 0.0
    %273 = vmatprep.subr.mxu0 0.0
    %274 = vmatpush1.msra.mxu0 0.0
    %275 = vmatprep.subr.mxu0 0.0
    %276 = vmatpush1.msra.mxu0 0.0
    %277 = vmatprep.subr.mxu0 0.0
    %278 = vmatpush1.msra.mxu0 0.0
    %279 = vmatprep.subr.mxu0 0.0
    %280 = vmatpush1.msra.mxu0 0.0
    %281 = vmatprep.subr.mxu0 0.0
    %282 = vmatpush1.msra.mxu0 0.0
    %283 = vmatprep.subr.mxu0 0.0
    %284 = vmatpush1.msra.mxu0 0.0
    %285 = vmatprep.subr.mxu0 0.0
    %286 = vmatpush1.msra.mxu0 0.0
    %287 = vmatprep.subr.mxu0 0.0
    %288 = vmatpush1.msra.mxu0 0.0
    %289 = vmatprep.subr.mxu0 0.0
    %290 = vmatpush1.msra.mxu0 0.0
    %291 = vmatprep.mubr.f32.mxu0 0.0
    %292 = vmatmul.mubr.f32.gmra.mrb[0].mxu0 %v146
    %v293 = vpop.f32.mrb[0].mxu0
    %v294 = vadd.f32 0.0, %v293
    %v295 = vpop.f32.mrb[0].mxu0
    %v296 = vadd.f32 0.0, %v295
    %297 = vmatprep.mubr.f32.mxu0 0.0
    %298 = vmatmul.mubr.f32.gmra.mrb[0].mxu0 %v148
    %v299 = vpop.f32.mrb[0].mxu0
    %v300 = vadd.f32 0.0, %v299
    %v301 = vpop.f32.mrb[0].mxu0
    %v302 = vadd.f32 0.0, %v301
    %303 = vdwg.mxu0
    %v304 = vsel %vm145, %v80, 0
    %v306 = vsel %vm145, %v81, 0
    %308 = vmatprep.subr.mxu0 %v83
    %309 = vmatpush1.msra.mxu0 %v82
    %310 = vmatprep.subr.mxu0 %v87
    %311 = vmatpush1.msra.mxu0 %v86
    %312 = vmatprep.subr.mxu0 %v91
    %313 = vmatpush1.msra.mxu0 %v90
    %314 = vmatprep.subr.mxu0 %v95
    %315 = vmatpush1.msra.mxu0 %v94
    %316 = vmatprep.subr.mxu0 %v99
    %317 = vmatpush1.msra.mxu0 %v98
    %318 = vmatprep.subr.mxu0 %v103
    %319 = vmatpush1.msra.mxu0 %v102
    %320 = vmatprep.subr.mxu0 %v107
    %321 = vmatpush1.msra.mxu0 %v106
    %322 = vmatprep.subr.mxu0 0.0
    %323 = vmatpush1.msra.mxu0 0.0
    %324 = vmatprep.subr.mxu0 0.0
    %325 = vmatpush1.msra.mxu0 0.0
    %326 = vmatprep.subr.mxu0 0.0
    %327 = vmatpush1.msra.mxu0 0.0
    %328 = vmatprep.subr.mxu0 0.0
    %329 = vmatpush1.msra.mxu0 0.0
    %330 = vmatprep.subr.mxu0 0.0
    %331 = vmatpush1.msra.mxu0 0.0
    %332 = vmatprep.subr.mxu0 0.0
    %333 = vmatpush1.msra.mxu0 0.0
    %334 = vmatprep.subr.mxu0 0.0
    %335 = vmatpush1.msra.mxu0 0.0
    %336 = vmatprep.subr.mxu0 0.0
    %337 = vmatpush1.msra.mxu0 0.0
    %338 = vmatprep.subr.mxu0 0.0
    %339 = vmatpush1.msra.mxu0 0.0
    %340 = vmatprep.subr.mxu0 0.0
    %341 = vmatpush1.msra.mxu0 0.0
    %342 = vmatprep.subr.mxu0 0.0
    %343 = vmatpush1.msra.mxu0 0.0
    %344 = vmatprep.subr.mxu0 0.0
    %345 = vmatpush1.msra.mxu0 0.0
    %346 = vmatprep.subr.mxu0 0.0
    %347 = vmatpush1.msra.mxu0 0.0
    %348 = vmatprep.subr.mxu0 0.0
    %349 = vmatpush1.msra.mxu0 0.0
    %350 = vmatprep.subr.mxu0 0.0
    %351 = vmatpush1.msra.mxu0 0.0
    %352 = vmatprep.subr.mxu0 0.0
    %353 = vmatpush1.msra.mxu0 0.0
    %354 = vmatprep.subr.mxu0 0.0
    %355 = vmatpush1.msra.mxu0 0.0
    %356 = vmatprep.subr.mxu0 0.0
    %357 = vmatpush1.msra.mxu0 0.0
    %358 = vmatprep.subr.mxu0 0.0
    %359 = vmatpush1.msra.mxu0 0.0
    %360 = vmatprep.subr.mxu0 0.0
    %361 = vmatpush1.msra.mxu0 0.0
    %362 = vmatprep.subr.mxu0 0.0
    %363 = vmatpush1.msra.mxu0 0.0
    %364 = vmatprep.subr.mxu0 0.0
    %365 = vmatpush1.msra.mxu0 0.0
    %366 = vmatprep.subr.mxu0 0.0
    %367 = vmatpush1.msra.mxu0 0.0
    %368 = vmatprep.subr.mxu0 0.0
    %369 = vmatpush1.msra.mxu0 0.0
    %370 = vmatprep.subr.mxu0 0.0
    %371 = vmatpush1.msra.mxu0 0.0
    %372 = vmatprep.mubr.f32.mxu0 0.0
    %373 = vmatmul.mubr.f32.gmra.mrb[0].mxu0 %v304
    %v374 = vpop.f32.mrb[0].mxu0
    %v375 = vadd.f32 %v217, %v374
    %v376 = vpop.f32.mrb[0].mxu0
    %v377 = vadd.f32 %v219, %v376
    %378 = vmatprep.mubr.f32.mxu0 0.0
    %379 = vmatmul.mubr.f32.gmra.mrb[0].mxu0 %v306
    %v380 = vpop.f32.mrb[0].mxu0
    %v381 = vadd.f32 %v223, %v380
    %v382 = vpop.f32.mrb[0].mxu0
    %v383 = vadd.f32 %v225, %v382
    %384 = vdwg.mxu0
    %385 = vmatprep.subr.mxu0 %v85
    %386 = vmatpush1.msra.mxu0 %v84
    %387 = vmatprep.subr.mxu0 %v89
    %388 = vmatpush1.msra.mxu0 %v88
    %389 = vmatprep.subr.mxu0 %v93
    %390 = vmatpush1.msra.mxu0 %v92
    %391 = vmatprep.subr.mxu0 %v97
    %392 = vmatpush1.msra.mxu0 %v96
    %393 = vmatprep.subr.mxu0 %v101
    %394 = vmatpush1.msra.mxu0 %v100
    %395 = vmatprep.subr.mxu0 %v105
    %396 = vmatpush1.msra.mxu0 %v104
    %397 = vmatprep.subr.mxu0 %v109
    %398 = vmatpush1.msra.mxu0 %v108
    %399 = vmatprep.subr.mxu0 0.0
    %400 = vmatpush1.msra.mxu0 0.0
    %401 = vmatprep.subr.mxu0 0.0
    %402 = vmatpush1.msra.mxu0 0.0
    %403 = vmatprep.subr.mxu0 0.0
    %404 = vmatpush1.msra.mxu0 0.0
    %405 = vmatprep.subr.mxu0 0.0
    %406 = vmatpush1.msra.mxu0 0.0
    %407 = vmatprep.subr.mxu0 0.0
    %408 = vmatpush1.msra.mxu0 0.0
    %409 = vmatprep.subr.mxu0 0.0
    %410 = vmatpush1.msra.mxu0 0.0
    %411 = vmatprep.subr.mxu0 0.0
    %412 = vmatpush1.msra.mxu0 0.0
    %413 = vmatprep.subr.mxu0 0.0
    %414 = vmatpush1.msra.mxu0 0.0
    %415 = vmatprep.subr.mxu0 0.0
    %416 = vmatpush1.msra.mxu0 0.0
    %417 = vmatprep.subr.mxu0 0.0
    %418 = vmatpush1.msra.mxu0 0.0
    %419 = vmatprep.subr.mxu0 0.0
    %420 = vmatpush1.msra.mxu0 0.0
    %421 = vmatprep.subr.mxu0 0.0
    %422 = vmatpush1.msra.mxu0 0.0
    %423 = vmatprep.subr.mxu0 0.0
    %424 = vmatpush1.msra.mxu0 0.0
    %425 = vmatprep.subr.mxu0 0.0
    %426 = vmatpush1.msra.mxu0 0.0
    %427 = vmatprep.subr.mxu0 0.0
    %428 = vmatpush1.msra.mxu0 0.0
    %429 = vmatprep.subr.mxu0 0.0
    %430 = vmatpush1.msra.mxu0 0.0
    %431 = vmatprep.subr.mxu0 0.0
    %432 = vmatpush1.msra.mxu0 0.0
    %433 = vmatprep.subr.mxu0 0.0
    %434 = vmatpush1.msra.mxu0 0.0
    %435 = vmatprep.subr.mxu0 0.0
    %436 = vmatpush1.msra.mxu0 0.0
    %437 = vmatprep.subr.mxu0 0.0
    %438 = vmatpush1.msra.mxu0 0.0
    %439 = vmatprep.subr.mxu0 0.0
    %440 = vmatpush1.msra.mxu0 0.0
    %441 = vmatprep.subr.mxu0 0.0
    %442 = vmatpush1.msra.mxu0 0.0
    %443 = vmatprep.subr.mxu0 0.0
    %444 = vmatpush1.msra.mxu0 0.0
    %445 = vmatprep.subr.mxu0 0.0
    %446 = vmatpush1.msra.mxu0 0.0
    %447 = vmatprep.subr.mxu0 0.0
    %448 = vmatpush1.msra.mxu0 0.0
    %449 = vmatprep.mubr.f32.mxu0 0.0
    %450 = vmatmul.mubr.f32.gmra.mrb[0].mxu0 %v304
    %v451 = vpop.f32.mrb[0].mxu0
    %v452 = vadd.f32 %v294, %v451
    %v453 = vpop.f32.mrb[0].mxu0
    %v454 = vadd.f32 %v296, %v453
    %455 = vmatprep.mubr.f32.mxu0 0.0
    %456 = vmatmul.mubr.f32.gmra.mrb[0].mxu0 %v306
    %v457 = vpop.f32.mrb[0].mxu0
    %v458 = vadd.f32 %v300, %v457
    %v459 = vpop.f32.mrb[0].mxu0
    %v460 = vadd.f32 %v302, %v459
    %461 = vdwg.mxu0
    %s462 = scalar_lea.vmem [#allocation2], 448
    %v463 = vld [vmem:[%s462] sm:$0xff]
    %v464 = vld [vmem:[%s462 + $0x8] sm:$0xff]
    %v465 = vld [vmem:[%s462 + $0x10] sm:$0xff]
    %v466 = vld [vmem:[%s462 + $0x18] sm:$0xff]
    %v467 = vld [vmem:[%s462 + $0x20] sm:$0xff]
    %v468 = vld [vmem:[%s462 + $0x28] sm:$0xff]
    %v469 = vld [vmem:[%s462 + $0x30] sm:$0xff]
    %v470 = vld [vmem:[%s462 + $0x38] sm:$0xff]
    %v471 = vld [vmem:[%s462 + $0x40] sm:$0xff]
    %v472 = vld [vmem:[%s462 + $0x48] sm:$0xff]
    %v473 = vld [vmem:[%s462 + $0x50] sm:$0xff]
    %v474 = vld [vmem:[%s462 + $0x58] sm:$0xff]
    %v475 = vld [vmem:[%s462 + $0x60] sm:$0xff]
    %v476 = vld [vmem:[%s462 + $0x68] sm:$0xff]
    %v477 = vld [vmem:[%s462 + $0x70] sm:$0xff]
    %v478 = vld [vmem:[%s462 + $0x78] sm:$0xff]
    %v479 = vld [vmem:[%s462 + $0x80] sm:$0xff]
    %v480 = vld [vmem:[%s462 + $0x88] sm:$0xff]
    %v481 = vld [vmem:[%s462 + $0x90] sm:$0xff]
    %v482 = vld [vmem:[%s462 + $0x98] sm:$0xff]
    %v483 = vld [vmem:[%s462 + $0xa0] sm:$0xff]
    %v484 = vld [vmem:[%s462 + $0xa8] sm:$0xff]
    %v485 = vld [vmem:[%s462 + $0xb0] sm:$0xff]
    %v486 = vld [vmem:[%s462 + $0xb8] sm:$0xff]
    %v487 = vld [vmem:[%s462 + $0xc0] sm:$0xff]
    %v488 = vld [vmem:[%s462 + $0xc8] sm:$0xff]
    %v489 = vld [vmem:[%s462 + $0xd0] sm:$0xff]
    %v490 = vld [vmem:[%s462 + $0xd8] sm:$0xff]
    %vm491 = vcmask 1045504
    %v492 = vrot.slane %v80, 2
    %v493 = vrot.slane %v81, 2
    %v494 = vsel %vm491, %v492, %v493
    %v495 = vsel %vm145, %v494, 0
    %v497 = vsel %vm145, %v493, 0
    %499 = vmatprep.subr.mxu0 %v464
    %500 = vmatpush1.msra.mxu0 %v463
    %501 = vmatprep.subr.mxu0 %v468
    %502 = vmatpush1.msra.mxu0 %v467
    %503 = vmatprep.subr.mxu0 %v472
    %504 = vmatpush1.msra.mxu0 %v471
    %505 = vmatprep.subr.mxu0 %v476
    %506 = vmatpush1.msra.mxu0 %v475
    %507 = vmatprep.subr.mxu0 %v480
    %508 = vmatpush1.msra.mxu0 %v479
    %509 = vmatprep.subr.mxu0 %v484
    %510 = vmatpush1.msra.mxu0 %v483
    %511 = vmatprep.subr.mxu0 %v488
    %512 = vmatpush1.msra.mxu0 %v487
    %513 = vmatprep.subr.mxu0 0.0
    %514 = vmatpush1.msra.mxu0 0.0
    %515 = vmatprep.subr.mxu0 0.0
    %516 = vmatpush1.msra.mxu0 0.0
    %517 = vmatprep.subr.mxu0 0.0
    %518 = vmatpush1.msra.mxu0 0.0
    %519 = vmatprep.subr.mxu0 0.0
    %520 = vmatpush1.msra.mxu0 0.0
    %521 = vmatprep.subr.mxu0 0.0
    %522 = vmatpush1.msra.mxu0 0.0
    %523 = vmatprep.subr.mxu0 0.0
    %524 = vmatpush1.msra.mxu0 0.0
    %525 = vmatprep.subr.mxu0 0.0
    %526 = vmatpush1.msra.mxu0 0.0
    %527 = vmatprep.subr.mxu0 0.0
    %528 = vmatpush1.msra.mxu0 0.0
    %529 = vmatprep.subr.mxu0 0.0
    %530 = vmatpush1.msra.mxu0 0.0
    %531 = vmatprep.subr.mxu0 0.0
    %532 = vmatpush1.msra.mxu0 0.0
    %533 = vmatprep.subr.mxu0 0.0
    %534 = vmatpush1.msra.mxu0 0.0
    %535 = vmatprep.subr.mxu0 0.0
    %536 = vmatpush1.msra.mxu0 0.0
    %537 = vmatprep.subr.mxu0 0.0
    %538 = vmatpush1.msra.mxu0 0.0
    %539 = vmatprep.subr.mxu0 0.0
    %540 = vmatpush1.msra.mxu0 0.0
    %541 = vmatprep.subr.mxu0 0.0
    %542 = vmatpush1.msra.mxu0 0.0
    %543 = vmatprep.subr.mxu0 0.0
    %544 = vmatpush1.msra.mxu0 0.0
    %545 = vmatprep.subr.mxu0 0.0
    %546 = vmatpush1.msra.mxu0 0.0
    %547 = vmatprep.subr.mxu0 0.0
    %548 = vmatpush1.msra.mxu0 0.0
    %549 = vmatprep.subr.mxu0 0.0
    %550 = vmatpush1.msra.mxu0 0.0
    %551 = vmatprep.subr.mxu0 0.0
    %552 = vmatpush1.msra.mxu0 0.0
    %553 = vmatprep.subr.mxu0 0.0
    %554 = vmatpush1.msra.mxu0 0.0
    %555 = vmatprep.subr.mxu0 0.0
    %556 = vmatpush1.msra.mxu0 0.0
    %557 = vmatprep.subr.mxu0 0.0
    %558 = vmatpush1.msra.mxu0 0.0
    %559 = vmatprep.subr.mxu0 0.0
    %560 = vmatpush1.msra.mxu0 0.0
    %561 = vmatprep.subr.mxu0 0.0
    %562 = vmatpush1.msra.mxu0 0.0
    %563 = vmatprep.mubr.f32.mxu0 0.0
    %564 = vmatmul.mubr.f32.gmra.mrb[0].mxu0 %v495
    %v565 = vpop.f32.mrb[0].mxu0
    %v566 = vadd.f32 0.0, %v565
    %v567 = vpop.f32.mrb[0].mxu0
    %v568 = vadd.f32 0.0, %v567
    %569 = vmatprep.mubr.f32.mxu0 0.0
    %570 = vmatmul.mubr.f32.gmra.mrb[0].mxu0 %v497
    %v571 = vpop.f32.mrb[0].mxu0
    %v572 = vadd.f32 0.0, %v571
    %v573 = vpop.f32.mrb[0].mxu0
    %v574 = vadd.f32 0.0, %v573
    %575 = vdwg.mxu0
    %576 = vmatprep.subr.mxu0 %v466
    %577 = vmatpush1.msra.mxu0 %v465
    %578 = vmatprep.subr.mxu0 %v470
    %579 = vmatpush1.msra.mxu0 %v469
    %580 = vmatprep.subr.mxu0 %v474
    %581 = vmatpush1.msra.mxu0 %v473
    %582 = vmatprep.subr.mxu0 %v478
    %583 = vmatpush1.msra.mxu0 %v477
    %584 = vmatprep.subr.mxu0 %v482
    %585 = vmatpush1.msra.mxu0 %v481
    %586 = vmatprep.subr.mxu0 %v486
    %587 = vmatpush1.msra.mxu0 %v485
    %588 = vmatprep.subr.mxu0 %v490
    %589 = vmatpush1.msra.mxu0 %v489
    %590 = vmatprep.subr.mxu0 0.0
    %591 = vmatpush1.msra.mxu0 0.0
    %592 = vmatprep.subr.mxu0 0.0
    %593 = vmatpush1.msra.mxu0 0.0
    %594 = vmatprep.subr.mxu0 0.0
    %595 = vmatpush1.msra.mxu0 0.0
    %596 = vmatprep.subr.mxu0 0.0
    %597 = vmatpush1.msra.mxu0 0.0
    %598 = vmatprep.subr.mxu0 0.0
    %599 = vmatpush1.msra.mxu0 0.0
    %600 = vmatprep.subr.mxu0 0.0
    %601 = vmatpush1.msra.mxu0 0.0
    %602 = vmatprep.subr.mxu0 0.0
    %603 = vmatpush1.msra.mxu0 0.0
    %604 = vmatprep.subr.mxu0 0.0
    %605 = vmatpush1.msra.mxu0 0.0
    %606 = vmatprep.subr.mxu0 0.0
    %607 = vmatpush1.msra.mxu0 0.0
    %608 = vmatprep.subr.mxu0 0.0
    %609 = vmatpush1.msra.mxu0 0.0
    %610 = vmatprep.subr.mxu0 0.0
    %611 = vmatpush1.msra.mxu0 0.0
    %612 = vmatprep.subr.mxu0 0.0
    %613 = vmatpush1.msra.mxu0 0.0
    %614 = vmatprep.subr.mxu0 0.0
    %615 = vmatpush1.msra.mxu0 0.0
    %616 = vmatprep.subr.mxu0 0.0
    %617 = vmatpush1.msra.mxu0 0.0
    %618 = vmatprep.subr.mxu0 0.0
    %619 = vmatpush1.msra.mxu0 0.0
    %620 = vmatprep.subr.mxu0 0.0
    %621 = vmatpush1.msra.mxu0 0.0
    %622 = vmatprep.subr.mxu0 0.0
    %623 = vmatpush1.msra.mxu0 0.0
    %624 = vmatprep.subr.mxu0 0.0
    %625 = vmatpush1.msra.mxu0 0.0
    %626 = vmatprep.subr.mxu0 0.0
    %627 = vmatpush1.msra.mxu0 0.0
    %628 = vmatprep.subr.mxu0 0.0
    %629 = vmatpush1.msra.mxu0 0.0
    %630 = vmatprep.subr.mxu0 0.0
    %631 = vmatpush1.msra.mxu0 0.0
    %632 = vmatprep.subr.mxu0 0.0
    %633 = vmatpush1.msra.mxu0 0.0
    %634 = vmatprep.subr.mxu0 0.0
    %635 = vmatpush1.msra.mxu0 0.0
    %636 = vmatprep.subr.mxu0 0.0
    %637 = vmatpush1.msra.mxu0 0.0
    %638 = vmatprep.subr.mxu0 0.0
    %639 = vmatpush1.msra.mxu0 0.0
    %640 = vmatprep.mubr.f32.mxu0 0.0
    %641 = vmatmul.mubr.f32.gmra.mrb[0].mxu0 %v495
    %v642 = vpop.f32.mrb[0].mxu0
    %v643 = vadd.f32 0.0, %v642
    %v644 = vpop.f32.mrb[0].mxu0
    %v645 = vadd.f32 0.0, %v644
    %646 = vmatprep.mubr.f32.mxu0 0.0
    %647 = vmatmul.mubr.f32.gmra.mrb[0].mxu0 %v497
    %v648 = vpop.f32.mrb[0].mxu0
    %v649 = vadd.f32 0.0, %v648
    %v650 = vpop.f32.mrb[0].mxu0
    %v651 = vadd.f32 0.0, %v650
    %652 = vdwg.mxu0
    %v653 = vadd.f32 %v375, %v566
    %v654 = vadd.f32 %v377, %v568
    %v655 = vadd.f32 %v452, %v643
    %v656 = vadd.f32 %v454, %v645
    %v657 = vadd.f32 %v381, %v572
    %v658 = vadd.f32 %v383, %v574
    %v659 = vadd.f32 %v458, %v649
    %v660 = vadd.f32 %v460, %v651
    %v661 = vmax.f32 %v653, %v654
    %v662 = vmax.f32 %v657, %v658
    %v663 = vmax.f32 %v655, %v656
    %v664 = vmax.f32 %v659, %v660
    %v665 = vmax.f32 %v661, %v663
    %v666 = vmax.f32 %v662, %v664
    %v667 = vld [vmem:[%s2] sm:$0x1]
    %v669 = vlaneseq
    %v670 = vshrl.u32 %v669, 7
    %v671 = vsub.s32 0, %v670
    %v672 = vrot.slane %v667, %v671
    %v674 = vadd.f32 %v665, %v672
    %v675 = vadd.f32 %v666, %v672
    %vm676 = vcmp.gt.f32.partialorder %v674, 0.0
    %vm677 = vcmp.gt.f32.partialorder %v675, 0.0
    %v678 = vmul.f32 %v674, 0.01
    %v679 = vmul.f32 %v675, 0.01
    %v680 = vsel %vm676, %v674, %v678
    %v681 = vsel %vm677, %v675, %v679
    %v682 = vld [vmem:[#allocation5] sm:$0xff]
    %v683 = vld [vmem:[#allocation5 + $0x8] sm:$0xff]
    %v684 = vld [vmem:[#allocation5 + $0x10] sm:$0xff]
    %v685 = vld [vmem:[#allocation5 + $0x18] sm:$0xff]
    %v686 = vld [vmem:[#allocation5 + $0x20] sm:$0xff]
    %v687 = vld [vmem:[#allocation5 + $0x28] sm:$0xff]
    %v688 = vld [vmem:[#allocation5 + $0x30] sm:$0xff]
    %v689 = vld [vmem:[#allocation5 + $0x38] sm:$0xff]
    %v690 = vld [vmem:[#allocation5 + $0x40] sm:$0xff]
    %v691 = vld [vmem:[#allocation5 + $0x48] sm:$0xff]
    %v692 = vld [vmem:[#allocation5 + $0x50] sm:$0xff]
    %v693 = vld [vmem:[#allocation5 + $0x58] sm:$0xff]
    %v694 = vld [vmem:[#allocation5 + $0x60] sm:$0xff]
    %v695 = vld [vmem:[#allocation5 + $0x68] sm:$0xff]
    %v696 = vld [vmem:[#allocation5 + $0x70] sm:$0xff]
    %v697 = vld [vmem:[#allocation5 + $0x78] sm:$0xff]
    %v698 = vld [vmem:[#allocation5 + $0x80] sm:$0xff]
    %v699 = vld [vmem:[#allocation5 + $0x88] sm:$0xff]
    %v700 = vld [vmem:[#allocation5 + $0x90] sm:$0xff]
    %v701 = vld [vmem:[#allocation5 + $0x98] sm:$0xff]
    %v702 = vld [vmem:[#allocation5 + $0xa0] sm:$0xff]
    %v703 = vld [vmem:[#allocation5 + $0xa8] sm:$0xff]
    %v704 = vld [vmem:[#allocation5 + $0xb0] sm:$0xff]
    %v705 = vld [vmem:[#allocation5 + $0xb8] sm:$0xff]
    %v706 = vld [vmem:[#allocation5 + $0xc0] sm:$0xff]
    %v707 = vld [vmem:[#allocation5 + $0xc8] sm:$0xff]
    %v708 = vld [vmem:[#allocation5 + $0xd0] sm:$0xff]
    %v709 = vld [vmem:[#allocation5 + $0xd8] sm:$0xff]
    %v710 = vld [vmem:[#allocation5 + $0xe0] sm:$0xff]
    %v711 = vld [vmem:[#allocation5 + $0xe8] sm:$0xff]
    %v712 = vld [vmem:[#allocation5 + $0xf0] sm:$0xff]
    %v713 = vld [vmem:[#allocation5 + $0xf8] sm:$0xff]
    %s714 = scalar_lea.vmem [#allocation5], 256
    %v715 = vld [vmem:[%s714] sm:$0xff]
    %v716 = vld [vmem:[%s714 + $0x8] sm:$0xff]
    %v717 = vld [vmem:[%s714 + $0x10] sm:$0xff]
    %v718 = vld [vmem:[%s714 + $0x18] sm:$0xff]
    %v719 = vld [vmem:[%s714 + $0x20] sm:$0xff]
    %v720 = vld [vmem:[%s714 + $0x28] sm:$0xff]
    %v721 = vld [vmem:[%s714 + $0x30] sm:$0xff]
    %v722 = vld [vmem:[%s714 + $0x38] sm:$0xff]
    %v723 = vld [vmem:[%s714 + $0x40] sm:$0xff]
    %v724 = vld [vmem:[%s714 + $0x48] sm:$0xff]
    %v725 = vld [vmem:[%s714 + $0x50] sm:$0xff]
    %v726 = vld [vmem:[%s714 + $0x58] sm:$0xff]
    %v727 = vld [vmem:[%s714 + $0x60] sm:$0xff]
    %v728 = vld [vmem:[%s714 + $0x68] sm:$0xff]
    %v729 = vld [vmem:[%s714 + $0x70] sm:$0xff]
    %v730 = vld [vmem:[%s714 + $0x78] sm:$0xff]
    %v731 = vld [vmem:[%s714 + $0x80] sm:$0xff]
    %v732 = vld [vmem:[%s714 + $0x88] sm:$0xff]
    %v733 = vld [vmem:[%s714 + $0x90] sm:$0xff]
    %v734 = vld [vmem:[%s714 + $0x98] sm:$0xff]
    %v735 = vld [vmem:[%s714 + $0xa0] sm:$0xff]
    %v736 = vld [vmem:[%s714 + $0xa8] sm:$0xff]
    %v737 = vld [vmem:[%s714 + $0xb0] sm:$0xff]
    %v738 = vld [vmem:[%s714 + $0xb8] sm:$0xff]
    %v739 = vld [vmem:[%s714 + $0xc0] sm:$0xff]
    %v740 = vld [vmem:[%s714 + $0xc8] sm:$0xff]
    %v741 = vld [vmem:[%s714 + $0xd0] sm:$0xff]
    %v742 = vld [vmem:[%s714 + $0xd8] sm:$0xff]
    %v743 = vld [vmem:[%s714 + $0xe0] sm:$0xff]
    %v744 = vld [vmem:[%s714 + $0xe8] sm:$0xff]
    %v745 = vld [vmem:[%s714 + $0xf0] sm:$0xff]
    %v746 = vld [vmem:[%s714 + $0xf8] sm:$0xff]
    %v749 = vrot.slane %v680, 1
    %v750 = vrot.slane %v681, 1
    %v751 = vsel %vm141, %v749, %v750
    %753 = vmatprep.subr.mxu0 %v716
    %754 = vmatpush1.msra.mxu0 %v715
    %755 = vmatprep.subr.mxu0 %v718
    %756 = vmatpush1.msra.mxu0 %v717
    %757 = vmatprep.subr.mxu0 %v720
    %758 = vmatpush1.msra.mxu0 %v719
    %759 = vmatprep.subr.mxu0 %v722
    %760 = vmatpush1.msra.mxu0 %v721
    %761 = vmatprep.subr.mxu0 %v724
    %762 = vmatpush1.msra.mxu0 %v723
    %763 = vmatprep.subr.mxu0 %v726
    %764 = vmatpush1.msra.mxu0 %v725
    %765 = vmatprep.subr.mxu0 %v728
    %766 = vmatpush1.msra.mxu0 %v727
    %767 = vmatprep.subr.mxu0 %v730
    %768 = vmatpush1.msra.mxu0 %v729
    %769 = vmatprep.subr.mxu0 %v732
    %770 = vmatpush1.msra.mxu0 %v731
    %771 = vmatprep.subr.mxu0 %v734
    %772 = vmatpush1.msra.mxu0 %v733
    %773 = vmatprep.subr.mxu0 %v736
    %774 = vmatpush1.msra.mxu0 %v735
    %775 = vmatprep.subr.mxu0 %v738
    %776 = vmatpush1.msra.mxu0 %v737
    %777 = vmatprep.subr.mxu0 %v740
    %778 = vmatpush1.msra.mxu0 %v739
    %779 = vmatprep.subr.mxu0 %v742
    %780 = vmatpush1.msra.mxu0 %v741
    %781 = vmatprep.subr.mxu0 %v744
    %782 = vmatpush1.msra.mxu0 %v743
    %783 = vmatprep.subr.mxu0 %v746
    %784 = vmatpush1.msra.mxu0 %v745
    %785 = vmatprep.subr.mxu0 0.0
    %786 = vmatpush1.msra.mxu0 0.0
    %787 = vmatprep.subr.mxu0 0.0
    %788 = vmatpush1.msra.mxu0 0.0
    %789 = vmatprep.subr.mxu0 0.0
    %790 = vmatpush1.msra.mxu0 0.0
    %791 = vmatprep.subr.mxu0 0.0
    %792 = vmatpush1.msra.mxu0 0.0
    %793 = vmatprep.subr.mxu0 0.0
    %794 = vmatpush1.msra.mxu0 0.0
    %795 = vmatprep.subr.mxu0 0.0
    %796 = vmatpush1.msra.mxu0 0.0
    %797 = vmatprep.subr.mxu0 0.0
    %798 = vmatpush1.msra.mxu0 0.0
    %799 = vmatprep.subr.mxu0 0.0
    %800 = vmatpush1.msra.mxu0 0.0
    %801 = vmatprep.subr.mxu0 0.0
    %802 = vmatpush1.msra.mxu0 0.0
    %803 = vmatprep.subr.mxu0 0.0
    %804 = vmatpush1.msra.mxu0 0.0
    %805 = vmatprep.subr.mxu0 0.0
    %806 = vmatpush1.msra.mxu0 0.0
    %807 = vmatprep.subr.mxu0 0.0
    %808 = vmatpush1.msra.mxu0 0.0
    %809 = vmatprep.subr.mxu0 0.0
    %810 = vmatpush1.msra.mxu0 0.0
    %811 = vmatprep.subr.mxu0 0.0
    %812 = vmatpush1.msra.mxu0 0.0
    %813 = vmatprep.subr.mxu0 0.0
    %814 = vmatpush1.msra.mxu0 0.0
    %815 = vmatprep.subr.mxu0 0.0
    %816 = vmatpush1.msra.mxu0 0.0
    %817 = vmatprep.mubr.f32.mxu0 0.0
    %818 = vmatmul.mubr.f32.gmra.mrb[0].mxu0 %v751
    %v819 = vpop.f32.mrb[0].mxu0
    %v820 = vadd.f32 0.0, %v819
    %v821 = vpop.f32.mrb[0].mxu0
    %v822 = vadd.f32 0.0, %v821
    %823 = vdwg.mxu0
    %824 = vmatprep.subr.mxu0 %v683
    %825 = vmatpush1.msra.mxu0 %v682
    %826 = vmatprep.subr.mxu0 %v685
    %827 = vmatpush1.msra.mxu0 %v684
    %828 = vmatprep.subr.mxu0 %v687
    %829 = vmatpush1.msra.mxu0 %v686
    %830 = vmatprep.subr.mxu0 %v689
    %831 = vmatpush1.msra.mxu0 %v688
    %832 = vmatprep.subr.mxu0 %v691
    %833 = vmatpush1.msra.mxu0 %v690
    %834 = vmatprep.subr.mxu0 %v693
    %835 = vmatpush1.msra.mxu0 %v692
    %836 = vmatprep.subr.mxu0 %v695
    %837 = vmatpush1.msra.mxu0 %v694
    %838 = vmatprep.subr.mxu0 %v697
    %839 = vmatpush1.msra.mxu0 %v696
    %840 = vmatprep.subr.mxu0 %v699
    %841 = vmatpush1.msra.mxu0 %v698
    %842 = vmatprep.subr.mxu0 %v701
    %843 = vmatpush1.msra.mxu0 %v700
    %844 = vmatprep.subr.mxu0 %v703
    %845 = vmatpush1.msra.mxu0 %v702
    %846 = vmatprep.subr.mxu0 %v705
    %847 = vmatpush1.msra.mxu0 %v704
    %848 = vmatprep.subr.mxu0 %v707
    %849 = vmatpush1.msra.mxu0 %v706
    %850 = vmatprep.subr.mxu0 %v709
    %851 = vmatpush1.msra.mxu0 %v708
    %852 = vmatprep.subr.mxu0 %v711
    %853 = vmatpush1.msra.mxu0 %v710
    %854 = vmatprep.subr.mxu0 %v713
    %855 = vmatpush1.msra.mxu0 %v712
    %856 = vmatprep.subr.mxu0 0.0
    %857 = vmatpush1.msra.mxu0 0.0
    %858 = vmatprep.subr.mxu0 0.0
    %859 = vmatpush1.msra.mxu0 0.0
    %860 = vmatprep.subr.mxu0 0.0
    %861 = vmatpush1.msra.mxu0 0.0
    %862 = vmatprep.subr.mxu0 0.0
    %863 = vmatpush1.msra.mxu0 0.0
    %864 = vmatprep.subr.mxu0 0.0
    %865 = vmatpush1.msra.mxu0 0.0
    %866 = vmatprep.subr.mxu0 0.0
    %867 = vmatpush1.msra.mxu0 0.0
    %868 = vmatprep.subr.mxu0 0.0
    %869 = vmatpush1.msra.mxu0 0.0
    %870 = vmatprep.subr.mxu0 0.0
    %871 = vmatpush1.msra.mxu0 0.0
    %872 = vmatprep.subr.mxu0 0.0
    %873 = vmatpush1.msra.mxu0 0.0
    %874 = vmatprep.subr.mxu0 0.0
    %875 = vmatpush1.msra.mxu0 0.0
    %876 = vmatprep.subr.mxu0 0.0
    %877 = vmatpush1.msra.mxu0 0.0
    %878 = vmatprep.subr.mxu0 0.0
    %879 = vmatpush1.msra.mxu0 0.0
    %880 = vmatprep.subr.mxu0 0.0
    %881 = vmatpush1.msra.mxu0 0.0
    %882 = vmatprep.subr.mxu0 0.0
    %883 = vmatpush1.msra.mxu0 0.0
    %884 = vmatprep.subr.mxu0 0.0
    %885 = vmatpush1.msra.mxu0 0.0
    %886 = vmatprep.subr.mxu0 0.0
    %887 = vmatpush1.msra.mxu0 0.0
    %888 = vmatprep.mubr.f32.mxu0 0.0
    %889 = vmatmul.mubr.f32.gmra.mrb[0].mxu0 %v680
    %v890 = vpop.f32.mrb[0].mxu0
    %v891 = vadd.f32 %v820, %v890
    %v892 = vpop.f32.mrb[0].mxu0
    %v893 = vadd.f32 %v822, %v892
    %894 = vdwg.mxu0
    %s895 = scalar_lea.vmem [#allocation5], 512
    %v896 = vld [vmem:[%s895] sm:$0xff]
    %v897 = vld [vmem:[%s895 + $0x8] sm:$0xff]
    %v898 = vld [vmem:[%s895 + $0x10] sm:$0xff]
    %v899 = vld [vmem:[%s895 + $0x18] sm:$0xff]
    %v900 = vld [vmem:[%s895 + $0x20] sm:$0xff]
    %v901 = vld [vmem:[%s895 + $0x28] sm:$0xff]
    %v902 = vld [vmem:[%s895 + $0x30] sm:$0xff]
    %v903 = vld [vmem:[%s895 + $0x38] sm:$0xff]
    %v904 = vld [vmem:[%s895 + $0x40] sm:$0xff]
    %v905 = vld [vmem:[%s895 + $0x48] sm:$0xff]
    %v906 = vld [vmem:[%s895 + $0x50] sm:$0xff]
    %v907 = vld [vmem:[%s895 + $0x58] sm:$0xff]
    %v908 = vld [vmem:[%s895 + $0x60] sm:$0xff]
    %v909 = vld [vmem:[%s895 + $0x68] sm:$0xff]
    %v910 = vld [vmem:[%s895 + $0x70] sm:$0xff]
    %v911 = vld [vmem:[%s895 + $0x78] sm:$0xff]
    %v912 = vld [vmem:[%s895 + $0x80] sm:$0xff]
    %v913 = vld [vmem:[%s895 + $0x88] sm:$0xff]
    %v914 = vld [vmem:[%s895 + $0x90] sm:$0xff]
    %v915 = vld [vmem:[%s895 + $0x98] sm:$0xff]
    %v916 = vld [vmem:[%s895 + $0xa0] sm:$0xff]
    %v917 = vld [vmem:[%s895 + $0xa8] sm:$0xff]
    %v918 = vld [vmem:[%s895 + $0xb0] sm:$0xff]
    %v919 = vld [vmem:[%s895 + $0xb8] sm:$0xff]
    %v920 = vld [vmem:[%s895 + $0xc0] sm:$0xff]
    %v921 = vld [vmem:[%s895 + $0xc8] sm:$0xff]
    %v922 = vld [vmem:[%s895 + $0xd0] sm:$0xff]
    %v923 = vld [vmem:[%s895 + $0xd8] sm:$0xff]
    %v924 = vld [vmem:[%s895 + $0xe0] sm:$0xff]
    %v925 = vld [vmem:[%s895 + $0xe8] sm:$0xff]
    %v926 = vld [vmem:[%s895 + $0xf0] sm:$0xff]
    %v927 = vld [vmem:[%s895 + $0xf8] sm:$0xff]
    %v928 = vrot.slane %v680, 2
    %v929 = vrot.slane %v681, 2
    %v930 = vsel %vm491, %v928, %v929
    %932 = vmatprep.subr.mxu0 %v897
    %933 = vmatpush1.msra.mxu0 %v896
    %934 = vmatprep.subr.mxu0 %v899
    %935 = vmatpush1.msra.mxu0 %v898
    %936 = vmatprep.subr.mxu0 %v901
    %937 = vmatpush1.msra.mxu0 %v900
    %938 = vmatprep.subr.mxu0 %v903
    %939 = vmatpush1.msra.mxu0 %v902
    %940 = vmatprep.subr.mxu0 %v905
    %941 = vmatpush1.msra.mxu0 %v904
    %942 = vmatprep.subr.mxu0 %v907
    %943 = vmatpush1.msra.mxu0 %v906
    %944 = vmatprep.subr.mxu0 %v909
    %945 = vmatpush1.msra.mxu0 %v908
    %946 = vmatprep.subr.mxu0 %v911
    %947 = vmatpush1.msra.mxu0 %v910
    %948 = vmatprep.subr.mxu0 %v913
    %949 = vmatpush1.msra.mxu0 %v912
    %950 = vmatprep.subr.mxu0 %v915
    %951 = vmatpush1.msra.mxu0 %v914
    %952 = vmatprep.subr.mxu0 %v917
    %953 = vmatpush1.msra.mxu0 %v916
    %954 = vmatprep.subr.mxu0 %v919
    %955 = vmatpush1.msra.mxu0 %v918
    %956 = vmatprep.subr.mxu0 %v921
    %957 = vmatpush1.msra.mxu0 %v920
    %958 = vmatprep.subr.mxu0 %v923
    %959 = vmatpush1.msra.mxu0 %v922
    %960 = vmatprep.subr.mxu0 %v925
    %961 = vmatpush1.msra.mxu0 %v924
    %962 = vmatprep.subr.mxu0 %v927
    %963 = vmatpush1.msra.mxu0 %v926
    %964 = vmatprep.subr.mxu0 0.0
    %965 = vmatpush1.msra.mxu0 0.0
    %966 = vmatprep.subr.mxu0 0.0
    %967 = vmatpush1.msra.mxu0 0.0
    %968 = vmatprep.subr.mxu0 0.0
    %969 = vmatpush1.msra.mxu0 0.0
    %970 = vmatprep.subr.mxu0 0.0
    %971 = vmatpush1.msra.mxu0 0.0
    %972 = vmatprep.subr.mxu0 0.0
    %973 = vmatpush1.msra.mxu0 0.0
    %974 = vmatprep.subr.mxu0 0.0
    %975 = vmatpush1.msra.mxu0 0.0
    %976 = vmatprep.subr.mxu0 0.0
    %977 = vmatpush1.msra.mxu0 0.0
    %978 = vmatprep.subr.mxu0 0.0
    %979 = vmatpush1.msra.mxu0 0.0
    %980 = vmatprep.subr.mxu0 0.0
    %981 = vmatpush1.msra.mxu0 0.0
    %982 = vmatprep.subr.mxu0 0.0
    %983 = vmatpush1.msra.mxu0 0.0
    %984 = vmatprep.subr.mxu0 0.0
    %985 = vmatpush1.msra.mxu0 0.0
    %986 = vmatprep.subr.mxu0 0.0
    %987 = vmatpush1.msra.mxu0 0.0
    %988 = vmatprep.subr.mxu0 0.0
    %989 = vmatpush1.msra.mxu0 0.0
    %990 = vmatprep.subr.mxu0 0.0
    %991 = vmatpush1.msra.mxu0 0.0
    %992 = vmatprep.subr.mxu0 0.0
    %993 = vmatpush1.msra.mxu0 0.0
    %994 = vmatprep.subr.mxu0 0.0
    %995 = vmatpush1.msra.mxu0 0.0
    %996 = vmatprep.mubr.f32.mxu0 0.0
    %997 = vmatmul.mubr.f32.gmra.mrb[0].mxu0 %v930
    %v998 = vpop.f32.mrb[0].mxu0
    %v999 = vadd.f32 0.0, %v998
    %v1000 = vpop.f32.mrb[0].mxu0
    %v1001 = vadd.f32 0.0, %v1000
    %1002 = vdwg.mxu0
    %v1003 = vadd.f32 %v891, %v999
    %v1004 = vadd.f32 %v893, %v1001
    %s1005 = scalar_lea.vmem [#allocation5], 768
    %v1006 = vld [vmem:[%s1005] sm:$0xff]
    %v1007 = vld [vmem:[%s1005 + $0x8] sm:$0xff]
    %v1008 = vld [vmem:[%s1005 + $0x10] sm:$0xff]
    %v1009 = vld [vmem:[%s1005 + $0x18] sm:$0xff]
    %v1010 = vld [vmem:[%s1005 + $0x20] sm:$0xff]
    %v1011 = vld [vmem:[%s1005 + $0x28] sm:$0xff]
    %v1012 = vld [vmem:[%s1005 + $0x30] sm:$0xff]
    %v1013 = vld [vmem:[%s1005 + $0x38] sm:$0xff]
    %v1014 = vld [vmem:[%s1005 + $0x40] sm:$0xff]
    %v1015 = vld [vmem:[%s1005 + $0x48] sm:$0xff]
    %v1016 = vld [vmem:[%s1005 + $0x50] sm:$0xff]
    %v1017 = vld [vmem:[%s1005 + $0x58] sm:$0xff]
    %v1018 = vld [vmem:[%s1005 + $0x60] sm:$0xff]
    %v1019 = vld [vmem:[%s1005 + $0x68] sm:$0xff]
    %v1020 = vld [vmem:[%s1005 + $0x70] sm:$0xff]
    %v1021 = vld [vmem:[%s1005 + $0x78] sm:$0xff]
    %v1022 = vld [vmem:[%s1005 + $0x80] sm:$0xff]
    %v1023 = vld [vmem:[%s1005 + $0x88] sm:$0xff]
    %v1024 = vld [vmem:[%s1005 + $0x90] sm:$0xff]
    %v1025 = vld [vmem:[%s1005 + $0x98] sm:$0xff]
    %v1026 = vld [vmem:[%s1005 + $0xa0] sm:$0xff]
    %v1027 = vld [vmem:[%s1005 + $0xa8] sm:$0xff]
    %v1028 = vld [vmem:[%s1005 + $0xb0] sm:$0xff]
    %v1029 = vld [vmem:[%s1005 + $0xb8] sm:$0xff]
    %v1030 = vld [vmem:[%s1005 + $0xc0] sm:$0xff]
    %v1031 = vld [vmem:[%s1005 + $0xc8] sm:$0xff]
    %v1032 = vld [vmem:[%s1005 + $0xd0] sm:$0xff]
    %v1033 = vld [vmem:[%s1005 + $0xd8] sm:$0xff]
    %v1034 = vld [vmem:[%s1005 + $0xe0] sm:$0xff]
    %v1035 = vld [vmem:[%s1005 + $0xe8] sm:$0xff]
    %v1036 = vld [vmem:[%s1005 + $0xf0] sm:$0xff]
    %v1037 = vld [vmem:[%s1005 + $0xf8] sm:$0xff]
    %vm1038 = vcmask 1044480
    %v1039 = vrot.slane %v680, 3
    %v1040 = vrot.slane %v681, 3
    %v1041 = vsel %vm1038, %v1039, %v1040
    %1043 = vmatprep.subr.mxu0 %v1007
    %1044 = vmatpush1.msra.mxu0 %v1006
    %1045 = vmatprep.subr.mxu0 %v1009
    %1046 = vmatpush1.msra.mxu0 %v1008
    %1047 = vmatprep.subr.mxu0 %v1011
    %1048 = vmatpush1.msra.mxu0 %v1010
    %1049 = vmatprep.subr.mxu0 %v1013
    %1050 = vmatpush1.msra.mxu0 %v1012
    %1051 = vmatprep.subr.mxu0 %v1015
    %1052 = vmatpush1.msra.mxu0 %v1014
    %1053 = vmatprep.subr.mxu0 %v1017
    %1054 = vmatpush1.msra.mxu0 %v1016
    %1055 = vmatprep.subr.mxu0 %v1019
    %1056 = vmatpush1.msra.mxu0 %v1018
    %1057 = vmatprep.subr.mxu0 %v1021
    %1058 = vmatpush1.msra.mxu0 %v1020
    %1059 = vmatprep.subr.mxu0 %v1023
    %1060 = vmatpush1.msra.mxu0 %v1022
    %1061 = vmatprep.subr.mxu0 %v1025
    %1062 = vmatpush1.msra.mxu0 %v1024
    %1063 = vmatprep.subr.mxu0 %v1027
    %1064 = vmatpush1.msra.mxu0 %v1026
    %1065 = vmatprep.subr.mxu0 %v1029
    %1066 = vmatpush1.msra.mxu0 %v1028
    %1067 = vmatprep.subr.mxu0 %v1031
    %1068 = vmatpush1.msra.mxu0 %v1030
    %1069 = vmatprep.subr.mxu0 %v1033
    %1070 = vmatpush1.msra.mxu0 %v1032
    %1071 = vmatprep.subr.mxu0 %v1035
    %1072 = vmatpush1.msra.mxu0 %v1034
    %1073 = vmatprep.subr.mxu0 %v1037
    %1074 = vmatpush1.msra.mxu0 %v1036
    %1075 = vmatprep.subr.mxu0 0.0
    %1076 = vmatpush1.msra.mxu0 0.0
    %1077 = vmatprep.subr.mxu0 0.0
    %1078 = vmatpush1.msra.mxu0 0.0
    %1079 = vmatprep.subr.mxu0 0.0
    %1080 = vmatpush1.msra.mxu0 0.0
    %1081 = vmatprep.subr.mxu0 0.0
    %1082 = vmatpush1.msra.mxu0 0.0
    %1083 = vmatprep.subr.mxu0 0.0
    %1084 = vmatpush1.msra.mxu0 0.0
    %1085 = vmatprep.subr.mxu0 0.0
    %1086 = vmatpush1.msra.mxu0 0.0
    %1087 = vmatprep.subr.mxu0 0.0
    %1088 = vmatpush1.msra.mxu0 0.0
    %1089 = vmatprep.subr.mxu0 0.0
    %1090 = vmatpush1.msra.mxu0 0.0
    %1091 = vmatprep.subr.mxu0 0.0
    %1092 = vmatpush1.msra.mxu0 0.0
    %1093 = vmatprep.subr.mxu0 0.0
    %1094 = vmatpush1.msra.mxu0 0.0
    %1095 = vmatprep.subr.mxu0 0.0
    %1096 = vmatpush1.msra.mxu0 0.0
    %1097 = vmatprep.subr.mxu0 0.0
    %1098 = vmatpush1.msra.mxu0 0.0
    %1099 = vmatprep.subr.mxu0 0.0
    %1100 = vmatpush1.msra.mxu0 0.0
    %1101 = vmatprep.subr.mxu0 0.0
    %1102 = vmatpush1.msra.mxu0 0.0
    %1103 = vmatprep.subr.mxu0 0.0
    %1104 = vmatpush1.msra.mxu0 0.0
    %1105 = vmatprep.subr.mxu0 0.0
    %1106 = vmatpush1.msra.mxu0 0.0
    %1107 = vmatprep.mubr.f32.mxu0 0.0
    %1108 = vmatmul.mubr.f32.gmra.mrb[0].mxu0 %v1041
    %v1109 = vpop.f32.mrb[0].mxu0
    %v1110 = vadd.f32 0.0, %v1109
    %v1111 = vpop.f32.mrb[0].mxu0
    %v1112 = vadd.f32 0.0, %v1111
    %1113 = vdwg.mxu0
    %v1114 = vadd.f32 %v1003, %v1110
    %v1115 = vadd.f32 %v1004, %v1112
    %s1116 = scalar_lea.vmem [#allocation5], 1024
    %v1117 = vld [vmem:[%s1116] sm:$0xff]
    %v1118 = vld [vmem:[%s1116 + $0x8] sm:$0xff]
    %v1119 = vld [vmem:[%s1116 + $0x10] sm:$0xff]
    %v1120 = vld [vmem:[%s1116 + $0x18] sm:$0xff]
    %v1121 = vld [vmem:[%s1116 + $0x20] sm:$0xff]
    %v1122 = vld [vmem:[%s1116 + $0x28] sm:$0xff]
    %v1123 = vld [vmem:[%s1116 + $0x30] sm:$0xff]
    %v1124 = vld [vmem:[%s1116 + $0x38] sm:$0xff]
    %v1125 = vld [vmem:[%s1116 + $0x40] sm:$0xff]
    %v1126 = vld [vmem:[%s1116 + $0x48] sm:$0xff]
    %v1127 = vld [vmem:[%s1116 + $0x50] sm:$0xff]
    %v1128 = vld [vmem:[%s1116 + $0x58] sm:$0xff]
    %v1129 = vld [vmem:[%s1116 + $0x60] sm:$0xff]
    %v1130 = vld [vmem:[%s1116 + $0x68] sm:$0xff]
    %v1131 = vld [vmem:[%s1116 + $0x70] sm:$0xff]
    %v1132 = vld [vmem:[%s1116 + $0x78] sm:$0xff]
    %v1133 = vld [vmem:[%s1116 + $0x80] sm:$0xff]
    %v1134 = vld [vmem:[%s1116 + $0x88] sm:$0xff]
    %v1135 = vld [vmem:[%s1116 + $0x90] sm:$0xff]
    %v1136 = vld [vmem:[%s1116 + $0x98] sm:$0xff]
    %v1137 = vld [vmem:[%s1116 + $0xa0] sm:$0xff]
    %v1138 = vld [vmem:[%s1116 + $0xa8] sm:$0xff]
    %v1139 = vld [vmem:[%s1116 + $0xb0] sm:$0xff]
    %v1140 = vld [vmem:[%s1116 + $0xb8] sm:$0xff]
    %v1141 = vld [vmem:[%s1116 + $0xc0] sm:$0xff]
    %v1142 = vld [vmem:[%s1116 + $0xc8] sm:$0xff]
    %v1143 = vld [vmem:[%s1116 + $0xd0] sm:$0xff]
    %v1144 = vld [vmem:[%s1116 + $0xd8] sm:$0xff]
    %v1145 = vld [vmem:[%s1116 + $0xe0] sm:$0xff]
    %v1146 = vld [vmem:[%s1116 + $0xe8] sm:$0xff]
    %v1147 = vld [vmem:[%s1116 + $0xf0] sm:$0xff]
    %v1148 = vld [vmem:[%s1116 + $0xf8] sm:$0xff]
    %vm1149 = vcmask 1043456
    %v1150 = vrot.slane %v680, 4
    %v1151 = vrot.slane %v681, 4
    %v1152 = vsel %vm1149, %v1150, %v1151
    %1154 = vmatprep.subr.mxu0 %v1118
    %1155 = vmatpush1.msra.mxu0 %v1117
    %1156 = vmatprep.subr.mxu0 %v1120
    %1157 = vmatpush1.msra.mxu0 %v1119
    %1158 = vmatprep.subr.mxu0 %v1122
    %1159 = vmatpush1.msra.mxu0 %v1121
    %1160 = vmatprep.subr.mxu0 %v1124
    %1161 = vmatpush1.msra.mxu0 %v1123
    %1162 = vmatprep.subr.mxu0 %v1126
    %1163 = vmatpush1.msra.mxu0 %v1125
    %1164 = vmatprep.subr.mxu0 %v1128
    %1165 = vmatpush1.msra.mxu0 %v1127
    %1166 = vmatprep.subr.mxu0 %v1130
    %1167 = vmatpush1.msra.mxu0 %v1129
    %1168 = vmatprep.subr.mxu0 %v1132
    %1169 = vmatpush1.msra.mxu0 %v1131
    %1170 = vmatprep.subr.mxu0 %v1134
    %1171 = vmatpush1.msra.mxu0 %v1133
    %1172 = vmatprep.subr.mxu0 %v1136
    %1173 = vmatpush1.msra.mxu0 %v1135
    %1174 = vmatprep.subr.mxu0 %v1138
    %1175 = vmatpush1.msra.mxu0 %v1137
    %1176 = vmatprep.subr.mxu0 %v1140
    %1177 = vmatpush1.msra.mxu0 %v1139
    %1178 = vmatprep.subr.mxu0 %v1142
    %1179 = vmatpush1.msra.mxu0 %v1141
    %1180 = vmatprep.subr.mxu0 %v1144
    %1181 = vmatpush1.msra.mxu0 %v1143
    %1182 = vmatprep.subr.mxu0 %v1146
    %1183 = vmatpush1.msra.mxu0 %v1145
    %1184 = vmatprep.subr.mxu0 %v1148
    %1185 = vmatpush1.msra.mxu0 %v1147
    %1186 = vmatprep.subr.mxu0 0.0
    %1187 = vmatpush1.msra.mxu0 0.0
    %1188 = vmatprep.subr.mxu0 0.0
    %1189 = vmatpush1.msra.mxu0 0.0
    %1190 = vmatprep.subr.mxu0 0.0
    %1191 = vmatpush1.msra.mxu0 0.0
    %1192 = vmatprep.subr.mxu0 0.0
    %1193 = vmatpush1.msra.mxu0 0.0
    %1194 = vmatprep.subr.mxu0 0.0
    %1195 = vmatpush1.msra.mxu0 0.0
    %1196 = vmatprep.subr.mxu0 0.0
    %1197 = vmatpush1.msra.mxu0 0.0
    %1198 = vmatprep.subr.mxu0 0.0
    %1199 = vmatpush1.msra.mxu0 0.0
    %1200 = vmatprep.subr.mxu0 0.0
    %1201 = vmatpush1.msra.mxu0 0.0
    %1202 = vmatprep.subr.mxu0 0.0
    %1203 = vmatpush1.msra.mxu0 0.0
    %1204 = vmatprep.subr.mxu0 0.0
    %1205 = vmatpush1.msra.mxu0 0.0
    %1206 = vmatprep.subr.mxu0 0.0
    %1207 = vmatpush1.msra.mxu0 0.0
    %1208 = vmatprep.subr.mxu0 0.0
    %1209 = vmatpush1.msra.mxu0 0.0
    %1210 = vmatprep.subr.mxu0 0.0
    %1211 = vmatpush1.msra.mxu0 0.0
    %1212 = vmatprep.subr.mxu0 0.0
    %1213 = vmatpush1.msra.mxu0 0.0
    %1214 = vmatprep.subr.mxu0 0.0
    %1215 = vmatpush1.msra.mxu0 0.0
    %1216 = vmatprep.subr.mxu0 0.0
    %1217 = vmatpush1.msra.mxu0 0.0
    %1218 = vmatprep.mubr.f32.mxu0 0.0
    %1219 = vmatmul.mubr.f32.gmra.mrb[0].mxu0 %v1152
    %v1220 = vpop.f32.mrb[0].mxu0
    %v1221 = vadd.f32 0.0, %v1220
    %v1222 = vpop.f32.mrb[0].mxu0
    %v1223 = vadd.f32 0.0, %v1222
    %1224 = vdwg.mxu0
    %v1225 = vadd.f32 %v1114, %v1221
    %v1226 = vadd.f32 %v1115, %v1223
    %v1227 = vmax.f32 %v1225, %v1226
    %v1228 = vld [vmem:[%s4] sm:$0x1]
    %v1230 = vlaneseq
    %v1231 = vshrl.u32 %v1230, 7
    %v1232 = vsub.s32 0, %v1231
    %v1233 = vrot.slane %v1228, %v1232
    %v1235 = vadd.f32 %v1227, %v1233
    %vm1236 = vcmp.gt.f32.partialorder %v1235, 0.0
    %v1237 = vmul.f32 %v1235, 0.01
    %v1238 = vsel %vm1236, %v1235, %v1237
    %v1239 = vld [vmem:[%s6] sm:$0x1]
    %v1241 = vrot.slane %v1238, 1
    %v1243 = vmax.f32 %v1238, %v1241
    %v1244 = vld [vmem:[#allocation7] sm:$0xff]
    %v1245 = vld [vmem:[#allocation7 + $0x8] sm:$0xff]
    %v1246 = vld [vmem:[#allocation7 + $0x10] sm:$0xff]
    %v1247 = vld [vmem:[#allocation7 + $0x18] sm:$0xff]
    %v1248 = vld [vmem:[#allocation7 + $0x20] sm:$0xff]
    %v1249 = vld [vmem:[#allocation7 + $0x28] sm:$0xff]
    %v1250 = vld [vmem:[#allocation7 + $0x30] sm:$0xff]
    %v1251 = vld [vmem:[#allocation7 + $0x38] sm:$0xff]
    %v1252 = vld [vmem:[#allocation7 + $0x40] sm:$0xff]
    %v1253 = vld [vmem:[#allocation7 + $0x48] sm:$0xff]
    %v1254 = vld [vmem:[#allocation7 + $0x50] sm:$0xff]
    %v1255 = vld [vmem:[#allocation7 + $0x58] sm:$0xff]
    %v1256 = vld [vmem:[#allocation7 + $0x60] sm:$0xff]
    %v1257 = vld [vmem:[#allocation7 + $0x68] sm:$0xff]
    %v1258 = vld [vmem:[#allocation7 + $0x70] sm:$0xff]
    %v1259 = vld [vmem:[#allocation7 + $0x78] sm:$0xff]
    %1260 = vmatprep.subr.mxu0 0.0
    %1261 = vmatpush1.msra.mxu0 %v1244
    %1262 = vmatprep.subr.mxu0 0.0
    %1263 = vmatpush1.msra.mxu0 %v1245
    %1264 = vmatprep.subr.mxu0 0.0
    %1265 = vmatpush1.msra.mxu0 %v1246
    %1266 = vmatprep.subr.mxu0 0.0
    %1267 = vmatpush1.msra.mxu0 %v1247
    %1268 = vmatprep.subr.mxu0 0.0
    %1269 = vmatpush1.msra.mxu0 %v1248
    %1270 = vmatprep.subr.mxu0 0.0
    %1271 = vmatpush1.msra.mxu0 %v1249
    %1272 = vmatprep.subr.mxu0 0.0
    %1273 = vmatpush1.msra.mxu0 %v1250
    %1274 = vmatprep.subr.mxu0 0.0
    %1275 = vmatpush1.msra.mxu0 %v1251
    %1276 = vmatprep.subr.mxu0 0.0
    %1277 = vmatpush1.msra.mxu0 %v1252
    %1278 = vmatprep.subr.mxu0 0.0
    %1279 = vmatpush1.msra.mxu0 %v1253
    %1280 = vmatprep.subr.mxu0 0.0
    %1281 = vmatpush1.msra.mxu0 %v1254
    %1282 = vmatprep.subr.mxu0 0.0
    %1283 = vmatpush1.msra.mxu0 %v1255
    %1284 = vmatprep.subr.mxu0 0.0
    %1285 = vmatpush1.msra.mxu0 %v1256
    %1286 = vmatprep.subr.mxu0 0.0
    %1287 = vmatpush1.msra.mxu0 %v1257
    %1288 = vmatprep.subr.mxu0 0.0
    %1289 = vmatpush1.msra.mxu0 %v1258
    %1290 = vmatprep.subr.mxu0 0.0
    %1291 = vmatpush1.msra.mxu0 %v1259
    %1292 = vmatprep.subr.mxu0 0.0
    %1293 = vmatpush1.msra.mxu0 0.0
    %1294 = vmatprep.subr.mxu0 0.0
    %1295 = vmatpush1.msra.mxu0 0.0
    %1296 = vmatprep.subr.mxu0 0.0
    %1297 = vmatpush1.msra.mxu0 0.0
    %1298 = vmatprep.subr.mxu0 0.0
    %1299 = vmatpush1.msra.mxu0 0.0
    %1300 = vmatprep.subr.mxu0 0.0
    %1301 = vmatpush1.msra.mxu0 0.0
    %1302 = vmatprep.subr.mxu0 0.0
    %1303 = vmatpush1.msra.mxu0 0.0
    %1304 = vmatprep.subr.mxu0 0.0
    %1305 = vmatpush1.msra.mxu0 0.0
    %1306 = vmatprep.subr.mxu0 0.0
    %1307 = vmatpush1.msra.mxu0 0.0
    %1308 = vmatprep.subr.mxu0 0.0
    %1309 = vmatpush1.msra.mxu0 0.0
    %1310 = vmatprep.subr.mxu0 0.0
    %1311 = vmatpush1.msra.mxu0 0.0
    %1312 = vmatprep.subr.mxu0 0.0
    %1313 = vmatpush1.msra.mxu0 0.0
    %1314 = vmatprep.subr.mxu0 0.0
    %1315 = vmatpush1.msra.mxu0 0.0
    %1316 = vmatprep.subr.mxu0 0.0
    %1317 = vmatpush1.msra.mxu0 0.0
    %1318 = vmatprep.subr.mxu0 0.0
    %1319 = vmatpush1.msra.mxu0 0.0
    %1320 = vmatprep.subr.mxu0 0.0
    %1321 = vmatpush1.msra.mxu0 0.0
    %1322 = vmatprep.subr.mxu0 0.0
    %1323 = vmatpush1.msra.mxu0 0.0
    %1324 = vmatprep.mubr.f32.mxu0 0.0
    %1325 = vmatmul.mubr.f32.gmra.mrb[0].mxu0 %v1243
    %v1326 = vpop.f32.mrb[0].mxu0
    %v1327 = vadd.f32 0.0, %v1326
    %v1328 = vpop.f32.mrb[0].mxu0
    %1329 = vdwg.mxu0
    %v1330 = vadd.f32 %v1239, %v1327
    %s1331 = scalar_lea.vmem [#allocation7], 128
    %v1332 = vld [vmem:[%s1331] sm:$0xff]
    %v1333 = vld [vmem:[%s1331 + $0x8] sm:$0xff]
    %v1334 = vld [vmem:[%s1331 + $0x10] sm:$0xff]
    %v1335 = vld [vmem:[%s1331 + $0x18] sm:$0xff]
    %v1336 = vld [vmem:[%s1331 + $0x20] sm:$0xff]
    %v1337 = vld [vmem:[%s1331 + $0x28] sm:$0xff]
    %v1338 = vld [vmem:[%s1331 + $0x30] sm:$0xff]
    %v1339 = vld [vmem:[%s1331 + $0x38] sm:$0xff]
    %v1340 = vld [vmem:[%s1331 + $0x40] sm:$0xff]
    %v1341 = vld [vmem:[%s1331 + $0x48] sm:$0xff]
    %v1342 = vld [vmem:[%s1331 + $0x50] sm:$0xff]
    %v1343 = vld [vmem:[%s1331 + $0x58] sm:$0xff]
    %v1344 = vld [vmem:[%s1331 + $0x60] sm:$0xff]
    %v1345 = vld [vmem:[%s1331 + $0x68] sm:$0xff]
    %v1346 = vld [vmem:[%s1331 + $0x70] sm:$0xff]
    %v1347 = vld [vmem:[%s1331 + $0x78] sm:$0xff]
    %v1349 = vrot.slane %v1243, 2
    %1351 = vmatprep.subr.mxu0 0.0
    %1352 = vmatpush1.msra.mxu0 %v1332
    %1353 = vmatprep.subr.mxu0 0.0
    %1354 = vmatpush1.msra.mxu0 %v1333
    %1355 = vmatprep.subr.mxu0 0.0
    %1356 = vmatpush1.msra.mxu0 %v1334
    %1357 = vmatprep.subr.mxu0 0.0
    %1358 = vmatpush1.msra.mxu0 %v1335
    %1359 = vmatprep.subr.mxu0 0.0
    %1360 = vmatpush1.msra.mxu0 %v1336
    %1361 = vmatprep.subr.mxu0 0.0
    %1362 = vmatpush1.msra.mxu0 %v1337
    %1363 = vmatprep.subr.mxu0 0.0
    %1364 = vmatpush1.msra.mxu0 %v1338
    %1365 = vmatprep.subr.mxu0 0.0
    %1366 = vmatpush1.msra.mxu0 %v1339
    %1367 = vmatprep.subr.mxu0 0.0
    %1368 = vmatpush1.msra.mxu0 %v1340
    %1369 = vmatprep.subr.mxu0 0.0
    %1370 = vmatpush1.msra.mxu0 %v1341
    %1371 = vmatprep.subr.mxu0 0.0
    %1372 = vmatpush1.msra.mxu0 %v1342
    %1373 = vmatprep.subr.mxu0 0.0
    %1374 = vmatpush1.msra.mxu0 %v1343
    %1375 = vmatprep.subr.mxu0 0.0
    %1376 = vmatpush1.msra.mxu0 %v1344
    %1377 = vmatprep.subr.mxu0 0.0
    %1378 = vmatpush1.msra.mxu0 %v1345
    %1379 = vmatprep.subr.mxu0 0.0
    %1380 = vmatpush1.msra.mxu0 %v1346
    %1381 = vmatprep.subr.mxu0 0.0
    %1382 = vmatpush1.msra.mxu0 %v1347
    %1383 = vmatprep.subr.mxu0 0.0
    %1384 = vmatpush1.msra.mxu0 0.0
    %1385 = vmatprep.subr.mxu0 0.0
    %1386 = vmatpush1.msra.mxu0 0.0
    %1387 = vmatprep.subr.mxu0 0.0
    %1388 = vmatpush1.msra.mxu0 0.0
    %1389 = vmatprep.subr.mxu0 0.0
    %1390 = vmatpush1.msra.mxu0 0.0
    %1391 = vmatprep.subr.mxu0 0.0
    %1392 = vmatpush1.msra.mxu0 0.0
    %1393 = vmatprep.subr.mxu0 0.0
    %1394 = vmatpush1.msra.mxu0 0.0
    %1395 = vmatprep.subr.mxu0 0.0
    %1396 = vmatpush1.msra.mxu0 0.0
    %1397 = vmatprep.subr.mxu0 0.0
    %1398 = vmatpush1.msra.mxu0 0.0
    %1399 = vmatprep.subr.mxu0 0.0
    %1400 = vmatpush1.msra.mxu0 0.0
    %1401 = vmatprep.subr.mxu0 0.0
    %1402 = vmatpush1.msra.mxu0 0.0
    %1403 = vmatprep.subr.mxu0 0.0
    %1404 = vmatpush1.msra.mxu0 0.0
    %1405 = vmatprep.subr.mxu0 0.0
    %1406 = vmatpush1.msra.mxu0 0.0
    %1407 = vmatprep.subr.mxu0 0.0
    %1408 = vmatpush1.msra.mxu0 0.0
    %1409 = vmatprep.subr.mxu0 0.0
    %1410 = vmatpush1.msra.mxu0 0.0
    %1411 = vmatprep.subr.mxu0 0.0
    %1412 = vmatpush1.msra.mxu0 0.0
    %1413 = vmatprep.subr.mxu0 0.0
    %1414 = vmatpush1.msra.mxu0 0.0
    %1415 = vmatprep.mubr.f32.mxu0 0.0
    %1416 = vmatmul.mubr.f32.gmra.mrb[0].mxu0 %v1349
    %v1417 = vpop.f32.mrb[0].mxu0
    %v1418 = vadd.f32 0.0, %v1417
    %v1419 = vpop.f32.mrb[0].mxu0
    %1420 = vdwg.mxu0
    %v1421 = vadd.f32 %v1330, %v1418
    %s1422 = scalar_lea.vmem [#allocation7], 256
    %v1423 = vld [vmem:[%s1422] sm:$0xff]
    %v1424 = vld [vmem:[%s1422 + $0x8] sm:$0xff]
    %v1425 = vld [vmem:[%s1422 + $0x10] sm:$0xff]
    %v1426 = vld [vmem:[%s1422 + $0x18] sm:$0xff]
    %v1427 = vld [vmem:[%s1422 + $0x20] sm:$0xff]
    %v1428 = vld [vmem:[%s1422 + $0x28] sm:$0xff]
    %v1429 = vld [vmem:[%s1422 + $0x30] sm:$0xff]
    %v1430 = vld [vmem:[%s1422 + $0x38] sm:$0xff]
    %v1431 = vld [vmem:[%s1422 + $0x40] sm:$0xff]
    %v1432 = vld [vmem:[%s1422 + $0x48] sm:$0xff]
    %v1433 = vld [vmem:[%s1422 + $0x50] sm:$0xff]
    %v1434 = vld [vmem:[%s1422 + $0x58] sm:$0xff]
    %v1435 = vld [vmem:[%s1422 + $0x60] sm:$0xff]
    %v1436 = vld [vmem:[%s1422 + $0x68] sm:$0xff]
    %v1437 = vld [vmem:[%s1422 + $0x70] sm:$0xff]
    %v1438 = vld [vmem:[%s1422 + $0x78] sm:$0xff]
    %v1439 = vrot.slane %v1243, 4
    %1441 = vmatprep.subr.mxu0 0.0
    %1442 = vmatpush1.msra.mxu0 %v1423
    %1443 = vmatprep.subr.mxu0 0.0
    %1444 = vmatpush1.msra.mxu0 %v1424
    %1445 = vmatprep.subr.mxu0 0.0
    %1446 = vmatpush1.msra.mxu0 %v1425
    %1447 = vmatprep.subr.mxu0 0.0
    %1448 = vmatpush1.msra.mxu0 %v1426
    %1449 = vmatprep.subr.mxu0 0.0
    %1450 = vmatpush1.msra.mxu0 %v1427
    %1451 = vmatprep.subr.mxu0 0.0
    %1452 = vmatpush1.msra.mxu0 %v1428
    %1453 = vmatprep.subr.mxu0 0.0
    %1454 = vmatpush1.msra.mxu0 %v1429
    %1455 = vmatprep.subr.mxu0 0.0
    %1456 = vmatpush1.msra.mxu0 %v1430
    %1457 = vmatprep.subr.mxu0 0.0
    %1458 = vmatpush1.msra.mxu0 %v1431
    %1459 = vmatprep.subr.mxu0 0.0
    %1460 = vmatpush1.msra.mxu0 %v1432
    %1461 = vmatprep.subr.mxu0 0.0
    %1462 = vmatpush1.msra.mxu0 %v1433
    %1463 = vmatprep.subr.mxu0 0.0
    %1464 = vmatpush1.msra.mxu0 %v1434
    %1465 = vmatprep.subr.mxu0 0.0
    %1466 = vmatpush1.msra.mxu0 %v1435
    %1467 = vmatprep.subr.mxu0 0.0
    %1468 = vmatpush1.msra.mxu0 %v1436
    %1469 = vmatprep.subr.mxu0 0.0
    %1470 = vmatpush1.msra.mxu0 %v1437
    %1471 = vmatprep.subr.mxu0 0.0
    %1472 = vmatpush1.msra.mxu0 %v1438
    %1473 = vmatprep.subr.mxu0 0.0
    %1474 = vmatpush1.msra.mxu0 0.0
    %1475 = vmatprep.subr.mxu0 0.0
    %1476 = vmatpush1.msra.mxu0 0.0
    %1477 = vmatprep.subr.mxu0 0.0
    %1478 = vmatpush1.msra.mxu0 0.0
    %1479 = vmatprep.subr.mxu0 0.0
    %1480 = vmatpush1.msra.mxu0 0.0
    %1481 = vmatprep.subr.mxu0 0.0
    %1482 = vmatpush1.msra.mxu0 0.0
    %1483 = vmatprep.subr.mxu0 0.0
    %1484 = vmatpush1.msra.mxu0 0.0
    %1485 = vmatprep.subr.mxu0 0.0
    %1486 = vmatpush1.msra.mxu0 0.0
    %1487 = vmatprep.subr.mxu0 0.0
    %1488 = vmatpush1.msra.mxu0 0.0
    %1489 = vmatprep.subr.mxu0 0.0
    %1490 = vmatpush1.msra.mxu0 0.0
    %1491 = vmatprep.subr.mxu0 0.0
    %1492 = vmatpush1.msra.mxu0 0.0
    %1493 = vmatprep.subr.mxu0 0.0
    %1494 = vmatpush1.msra.mxu0 0.0
    %1495 = vmatprep.subr.mxu0 0.0
    %1496 = vmatpush1.msra.mxu0 0.0
    %1497 = vmatprep.subr.mxu0 0.0
    %1498 = vmatpush1.msra.mxu0 0.0
    %1499 = vmatprep.subr.mxu0 0.0
    %1500 = vmatpush1.msra.mxu0 0.0
    %1501 = vmatprep.subr.mxu0 0.0
    %1502 = vmatpush1.msra.mxu0 0.0
    %1503 = vmatprep.subr.mxu0 0.0
    %1504 = vmatpush1.msra.mxu0 0.0
    %1505 = vmatprep.mubr.f32.mxu0 0.0
    %1506 = vmatmul.mubr.f32.gmra.mrb[0].mxu0 %v1439
    %v1507 = vpop.f32.mrb[0].mxu0
    %v1508 = vadd.f32 0.0, %v1507
    %v1509 = vpop.f32.mrb[0].mxu0
    %1510 = vdwg.mxu0
    %v1511 = vadd.f32 %v1421, %v1508
    %s1512 = scalar_lea.vmem [#allocation7], 384
    %v1513 = vld [vmem:[%s1512] sm:$0xff]
    %v1514 = vld [vmem:[%s1512 + $0x8] sm:$0xff]
    %v1515 = vld [vmem:[%s1512 + $0x10] sm:$0xff]
    %v1516 = vld [vmem:[%s1512 + $0x18] sm:$0xff]
    %v1517 = vld [vmem:[%s1512 + $0x20] sm:$0xff]
    %v1518 = vld [vmem:[%s1512 + $0x28] sm:$0xff]
    %v1519 = vld [vmem:[%s1512 + $0x30] sm:$0xff]
    %v1520 = vld [vmem:[%s1512 + $0x38] sm:$0xff]
    %v1521 = vld [vmem:[%s1512 + $0x40] sm:$0xff]
    %v1522 = vld [vmem:[%s1512 + $0x48] sm:$0xff]
    %v1523 = vld [vmem:[%s1512 + $0x50] sm:$0xff]
    %v1524 = vld [vmem:[%s1512 + $0x58] sm:$0xff]
    %v1525 = vld [vmem:[%s1512 + $0x60] sm:$0xff]
    %v1526 = vld [vmem:[%s1512 + $0x68] sm:$0xff]
    %v1527 = vld [vmem:[%s1512 + $0x70] sm:$0xff]
    %v1528 = vld [vmem:[%s1512 + $0x78] sm:$0xff]
    %v1529 = vrot.slane %v1243, 6
    %1531 = vmatprep.subr.mxu0 0.0
    %1532 = vmatpush1.msra.mxu0 %v1513
    %1533 = vmatprep.subr.mxu0 0.0
    %1534 = vmatpush1.msra.mxu0 %v1514
    %1535 = vmatprep.subr.mxu0 0.0
    %1536 = vmatpush1.msra.mxu0 %v1515
    %1537 = vmatprep.subr.mxu0 0.0
    %1538 = vmatpush1.msra.mxu0 %v1516
    %1539 = vmatprep.subr.mxu0 0.0
    %1540 = vmatpush1.msra.mxu0 %v1517
    %1541 = vmatprep.subr.mxu0 0.0
    %1542 = vmatpush1.msra.mxu0 %v1518
    %1543 = vmatprep.subr.mxu0 0.0
    %1544 = vmatpush1.msra.mxu0 %v1519
    %1545 = vmatprep.subr.mxu0 0.0
    %1546 = vmatpush1.msra.mxu0 %v1520
    %1547 = vmatprep.subr.mxu0 0.0
    %1548 = vmatpush1.msra.mxu0 %v1521
    %1549 = vmatprep.subr.mxu0 0.0
    %1550 = vmatpush1.msra.mxu0 %v1522
    %1551 = vmatprep.subr.mxu0 0.0
    %1552 = vmatpush1.msra.mxu0 %v1523
    %1553 = vmatprep.subr.mxu0 0.0
    %1554 = vmatpush1.msra.mxu0 %v1524
    %1555 = vmatprep.subr.mxu0 0.0
    %1556 = vmatpush1.msra.mxu0 %v1525
    %1557 = vmatprep.subr.mxu0 0.0
    %1558 = vmatpush1.msra.mxu0 %v1526
    %1559 = vmatprep.subr.mxu0 0.0
    %1560 = vmatpush1.msra.mxu0 %v1527
    %1561 = vmatprep.subr.mxu0 0.0
    %1562 = vmatpush1.msra.mxu0 %v1528
    %1563 = vmatprep.subr.mxu0 0.0
    %1564 = vmatpush1.msra.mxu0 0.0
    %1565 = vmatprep.subr.mxu0 0.0
    %1566 = vmatpush1.msra.mxu0 0.0
    %1567 = vmatprep.subr.mxu0 0.0
    %1568 = vmatpush1.msra.mxu0 0.0
    %1569 = vmatprep.subr.mxu0 0.0
    %1570 = vmatpush1.msra.mxu0 0.0
    %1571 = vmatprep.subr.mxu0 0.0
    %1572 = vmatpush1.msra.mxu0 0.0
    %1573 = vmatprep.subr.mxu0 0.0
    %1574 = vmatpush1.msra.mxu0 0.0
    %1575 = vmatprep.subr.mxu0 0.0
    %1576 = vmatpush1.msra.mxu0 0.0
    %1577 = vmatprep.subr.mxu0 0.0
    %1578 = vmatpush1.msra.mxu0 0.0
    %1579 = vmatprep.subr.mxu0 0.0
    %1580 = vmatpush1.msra.mxu0 0.0
    %1581 = vmatprep.subr.mxu0 0.0
    %1582 = vmatpush1.msra.mxu0 0.0
    %1583 = vmatprep.subr.mxu0 0.0
    %1584 = vmatpush1.msra.mxu0 0.0
    %1585 = vmatprep.subr.mxu0 0.0
    %1586 = vmatpush1.msra.mxu0 0.0
    %1587 = vmatprep.subr.mxu0 0.0
    %1588 = vmatpush1.msra.mxu0 0.0
    %1589 = vmatprep.subr.mxu0 0.0
    %1590 = vmatpush1.msra.mxu0 0.0
    %1591 = vmatprep.subr.mxu0 0.0
    %1592 = vmatpush1.msra.mxu0 0.0
    %1593 = vmatprep.subr.mxu0 0.0
    %1594 = vmatpush1.msra.mxu0 0.0
    %1595 = vmatprep.mubr.f32.mxu0 0.0
    %1596 = vmatmul.mubr.f32.gmra.mrb[0].mxu0 %v1529
    %v1597 = vpop.f32.mrb[0].mxu0
    %v1598 = vadd.f32 0.0, %v1597
    %v1599 = vpop.f32.mrb[0].mxu0
    %1600 = vdwg.mxu0
    %v1601 = vadd.f32 %v1511, %v1598
    %vm1602 = vcmp.gt.f32.partialorder %v1601, 0.0
    %v1603 = vmul.f32 %v1601, 0.01
    %v1604 = vsel %vm1602, %v1601, %v1603
    %v1605 = vld [vmem:[%s7] sm:$0xff]
    %v1606 = vld [vmem:[%s7 + $0x8] sm:$0xff]
    %v1607 = vld [vmem:[%s7 + $0x10] sm:$0xff]
    %v1608 = vld [vmem:[%s7 + $0x18] sm:$0xff]
    %v1609 = vld [vmem:[%s7 + $0x20] sm:$0xff]
    %v1610 = vld [vmem:[%s7 + $0x28] sm:$0xff]
    %v1611 = vld [vmem:[%s7 + $0x30] sm:$0xff]
    %v1612 = vld [vmem:[%s7 + $0x38] sm:$0xff]
    %v1613 = vld [vmem:[%s7 + $0x40] sm:$0xff]
    %v1614 = vld [vmem:[%s7 + $0x48] sm:$0xff]
    %v1615 = vld [vmem:[%s7 + $0x50] sm:$0xff]
    %v1616 = vld [vmem:[%s7 + $0x58] sm:$0xff]
    %v1617 = vld [vmem:[%s7 + $0x60] sm:$0xff]
    %v1618 = vld [vmem:[%s7 + $0x68] sm:$0xff]
    %v1619 = vld [vmem:[%s7 + $0x70] sm:$0xff]
    %v1620 = vld [vmem:[%s7 + $0x78] sm:$0xff]
    %v1621 = vld [vmem:[%s8] sm:$0x1]
    %1622 = vmatprep.subr.mxu0 0.0
    %1623 = vmatpush1.msra.mxu0 %v1605
    %1624 = vmatprep.subr.mxu0 0.0
    %1625 = vmatpush1.msra.mxu0 %v1606
    %1626 = vmatprep.subr.mxu0 0.0
    %1627 = vmatpush1.msra.mxu0 %v1607
    %1628 = vmatprep.subr.mxu0 0.0
    %1629 = vmatpush1.msra.mxu0 %v1608
    %1630 = vmatprep.subr.mxu0 0.0
    %1631 = vmatpush1.msra.mxu0 %v1609
    %1632 = vmatprep.subr.mxu0 0.0
    %1633 = vmatpush1.msra.mxu0 %v1610
    %1634 = vmatprep.subr.mxu0 0.0
    %1635 = vmatpush1.msra.mxu0 %v1611
    %1636 = vmatprep.subr.mxu0 0.0
    %1637 = vmatpush1.msra.mxu0 %v1612
    %1638 = vmatprep.subr.mxu0 0.0
    %1639 = vmatpush1.msra.mxu0 %v1613
    %1640 = vmatprep.subr.mxu0 0.0
    %1641 = vmatpush1.msra.mxu0 %v1614
    %1642 = vmatprep.subr.mxu0 0.0
    %1643 = vmatpush1.msra.mxu0 %v1615
    %1644 = vmatprep.subr.mxu0 0.0
    %1645 = vmatpush1.msra.mxu0 %v1616
    %1646 = vmatprep.subr.mxu0 0.0
    %1647 = vmatpush1.msra.mxu0 %v1617
    %1648 = vmatprep.subr.mxu0 0.0
    %1649 = vmatpush1.msra.mxu0 %v1618
    %1650 = vmatprep.subr.mxu0 0.0
    %1651 = vmatpush1.msra.mxu0 %v1619
    %1652 = vmatprep.subr.mxu0 0.0
    %1653 = vmatpush1.msra.mxu0 %v1620
    %1654 = vmatprep.subr.mxu0 0.0
    %1655 = vmatpush1.msra.mxu0 0.0
    %1656 = vmatprep.subr.mxu0 0.0
    %1657 = vmatpush1.msra.mxu0 0.0
    %1658 = vmatprep.subr.mxu0 0.0
    %1659 = vmatpush1.msra.mxu0 0.0
    %1660 = vmatprep.subr.mxu0 0.0
    %1661 = vmatpush1.msra.mxu0 0.0
    %1662 = vmatprep.subr.mxu0 0.0
    %1663 = vmatpush1.msra.mxu0 0.0
    %1664 = vmatprep.subr.mxu0 0.0
    %1665 = vmatpush1.msra.mxu0 0.0
    %1666 = vmatprep.subr.mxu0 0.0
    %1667 = vmatpush1.msra.mxu0 0.0
    %1668 = vmatprep.subr.mxu0 0.0
    %1669 = vmatpush1.msra.mxu0 0.0
    %1670 = vmatprep.subr.mxu0 0.0
    %1671 = vmatpush1.msra.mxu0 0.0
    %1672 = vmatprep.subr.mxu0 0.0
    %1673 = vmatpush1.msra.mxu0 0.0
    %1674 = vmatprep.subr.mxu0 0.0
    %1675 = vmatpush1.msra.mxu0 0.0
    %1676 = vmatprep.subr.mxu0 0.0
    %1677 = vmatpush1.msra.mxu0 0.0
    %1678 = vmatprep.subr.mxu0 0.0
    %1679 = vmatpush1.msra.mxu0 0.0
    %1680 = vmatprep.subr.mxu0 0.0
    %1681 = vmatpush1.msra.mxu0 0.0
    %1682 = vmatprep.subr.mxu0 0.0
    %1683 = vmatpush1.msra.mxu0 0.0
    %1684 = vmatprep.subr.mxu0 0.0
    %1685 = vmatpush1.msra.mxu0 0.0
    %1686 = vmatprep.mubr.f32.mxu0 0.0
    %1687 = vmatmul.mubr.f32.gmra.mrb[0].mxu0 %v1604
    %v1688 = vpop.f32.mrb[0].mxu0
    %v1689 = vadd.f32 %v1621, %v1688
    %v1690 = vpop.f32.mrb[0].mxu0
    %1691 = vdwg.mxu0
    %vm1692 = vcmp.gt.f32.partialorder %v1689, 0.0
    %v1693 = vmul.f32 %v1689, 0.01
    %v1694 = vsel %vm1692, %v1689, %v1693
    %v1695 = vld [vmem:[%s9] sm:$0xff]
    %v1696 = vld [vmem:[%s9 + $0x8] sm:$0xff]
    %v1697 = vld [vmem:[%s9 + $0x10] sm:$0xff]
    %v1698 = vld [vmem:[%s9 + $0x18] sm:$0xff]
    %v1699 = vld [vmem:[%s9 + $0x20] sm:$0xff]
    %v1700 = vld [vmem:[%s9 + $0x28] sm:$0xff]
    %v1701 = vld [vmem:[%s9 + $0x30] sm:$0xff]
    %v1702 = vld [vmem:[%s9 + $0x38] sm:$0xff]
    %v1703 = vld [vmem:[%s9 + $0x40] sm:$0xff]
    %v1704 = vld [vmem:[%s9 + $0x48] sm:$0xff]
    %v1705 = vld [vmem:[%s9 + $0x50] sm:$0xff]
    %v1706 = vld [vmem:[%s9 + $0x58] sm:$0xff]
    %v1707 = vld [vmem:[%s9 + $0x60] sm:$0xff]
    %v1708 = vld [vmem:[%s9 + $0x68] sm:$0xff]
    %v1709 = vld [vmem:[%s9 + $0x70] sm:$0xff]
    %v1710 = vld [vmem:[%s9 + $0x78] sm:$0xff]
    %v1711 = vld [vmem:[%s10] sm:$0x1]
    %1712 = vmatprep.subr.mxu0 0.0
    %1713 = vmatpush1.msra.mxu0 %v1695
    %1714 = vmatprep.subr.mxu0 0.0
    %1715 = vmatpush1.msra.mxu0 %v1696
    %1716 = vmatprep.subr.mxu0 0.0
    %1717 = vmatpush1.msra.mxu0 %v1697
    %1718 = vmatprep.subr.mxu0 0.0
    %1719 = vmatpush1.msra.mxu0 %v1698
    %1720 = vmatprep.subr.mxu0 0.0
    %1721 = vmatpush1.msra.mxu0 %v1699
    %1722 = vmatprep.subr.mxu0 0.0
    %1723 = vmatpush1.msra.mxu0 %v1700
    %1724 = vmatprep.subr.mxu0 0.0
    %1725 = vmatpush1.msra.mxu0 %v1701
    %1726 = vmatprep.subr.mxu0 0.0
    %1727 = vmatpush1.msra.mxu0 %v1702
    %1728 = vmatprep.subr.mxu0 0.0
    %1729 = vmatpush1.msra.mxu0 %v1703
    %1730 = vmatprep.subr.mxu0 0.0
    %1731 = vmatpush1.msra.mxu0 %v1704
    %1732 = vmatprep.subr.mxu0 0.0
    %1733 = vmatpush1.msra.mxu0 %v1705
    %1734 = vmatprep.subr.mxu0 0.0
    %1735 = vmatpush1.msra.mxu0 %v1706
    %1736 = vmatprep.subr.mxu0 0.0
    %1737 = vmatpush1.msra.mxu0 %v1707
    %1738 = vmatprep.subr.mxu0 0.0
    %1739 = vmatpush1.msra.mxu0 %v1708
    %1740 = vmatprep.subr.mxu0 0.0
    %1741 = vmatpush1.msra.mxu0 %v1709
    %1742 = vmatprep.subr.mxu0 0.0
    %1743 = vmatpush1.msra.mxu0 %v1710
    %1744 = vmatprep.subr.mxu0 0.0
    %1745 = vmatpush1.msra.mxu0 0.0
    %1746 = vmatprep.subr.mxu0 0.0
    %1747 = vmatpush1.msra.mxu0 0.0
    %1748 = vmatprep.subr.mxu0 0.0
    %1749 = vmatpush1.msra.mxu0 0.0
    %1750 = vmatprep.subr.mxu0 0.0
    %1751 = vmatpush1.msra.mxu0 0.0
    %1752 = vmatprep.subr.mxu0 0.0
    %1753 = vmatpush1.msra.mxu0 0.0
    %1754 = vmatprep.subr.mxu0 0.0
    %1755 = vmatpush1.msra.mxu0 0.0
    %1756 = vmatprep.subr.mxu0 0.0
    %1757 = vmatpush1.msra.mxu0 0.0
    %1758 = vmatprep.subr.mxu0 0.0
    %1759 = vmatpush1.msra.mxu0 0.0
    %1760 = vmatprep.subr.mxu0 0.0
    %1761 = vmatpush1.msra.mxu0 0.0
    %1762 = vmatprep.subr.mxu0 0.0
    %1763 = vmatpush1.msra.mxu0 0.0
    %1764 = vmatprep.subr.mxu0 0.0
    %1765 = vmatpush1.msra.mxu0 0.0
    %1766 = vmatprep.subr.mxu0 0.0
    %1767 = vmatpush1.msra.mxu0 0.0
    %1768 = vmatprep.subr.mxu0 0.0
    %1769 = vmatpush1.msra.mxu0 0.0
    %1770 = vmatprep.subr.mxu0 0.0
    %1771 = vmatpush1.msra.mxu0 0.0
    %1772 = vmatprep.subr.mxu0 0.0
    %1773 = vmatpush1.msra.mxu0 0.0
    %1774 = vmatprep.subr.mxu0 0.0
    %1775 = vmatpush1.msra.mxu0 0.0
    %1776 = vmatprep.mubr.f32.mxu0 0.0
    %1777 = vmatmul.mubr.f32.gmra.mrb[0].mxu0 %v1694
    %v1778 = vpop.f32.mrb[0].mxu0
    %v1779 = vadd.f32 %v1711, %v1778
    %v1780 = vpop.f32.mrb[0].mxu0
    %1781 = vdwg.mxu0
    %vm1782 = vcmask 73728
    %1783 = vst.msk [vmem:[#allocation8] sm:$0x1] %vm1782, %v1779
    // Predicated region
    $region58: #{cnn_forward.1} parent=1 // pred_check
      _
    $region59: #{cnn_forward.1} parent=1 // pred_check_branch
      %1785 = sbr.rel (0) target = $region61
    $region60: #{cnn_forward.1} parent=1 // pred_region
      %s1787 = ssub.s32 16, 16
      %1788 = vsyncadd [#allocation4], %s1787
      %s1790 = sshll.u32 [#allocation8], 4
      %s1791 = int_to_ptr.vmem [resolvable:$true] %s1790
      %1793 = dma.vmem_to_hbm [thread:$0]  %s1791, 16, %s11, [#allocation4]
    $region61: #{cnn_forward.1} parent=1 // pred_fallthru
      _
    // Predicated region
    $region62: #{cnn_forward.1} parent=1 // pred_check
      _
    $region63: #{cnn_forward.1} parent=1 // pred_check_branch
      %1795 = sbr.rel (0) target = $region65
    $region64: #{cnn_forward.1} parent=1 // pred_region
      %1796 = dma.done [#allocation4], 16
    $region65: #{cnn_forward.1} parent=1 // pred_fallthru
      _
    %1797 = vsyncpa [#allocation3], 1
    %1798 = vsyncpa [#allocation6], 1
    %1799 = vsyncpa [#allocation4], 1

</llo_original>
